<compile_context>
chip_gen: v7x
topology: tpu7x:2x2x1
jax: 0.10.0
libtpu: 0.0.40
codegen_flags: <defaults>
</compile_context>

<pallas_src>
import math
import numpy as np

import jax
import jax.numpy as jnp
from jax import lax
from jax.experimental import pallas as pl
from jax.experimental.pallas import tpu as pltpu

NEG_SLOPE = 0.01   # nn.LeakyReLU() default negative slope
KS = 5             # conv kernel size
PAD = 2            # circular padding on each side
N_LAYERS = 3


# ----------------------------------------------------------------------------
# In-kernel helper: one circular 5x5 conv layer on a lane-dense slab
# ----------------------------------------------------------------------------
def _conv5x5_circular_lanedense(x3, w_ref, b_ref):
    """x3    : (bb, H, W*Cin) f32 activation slab (VMEM values)
       w_ref : (KS, W*Cin, W*Cout) block-circulant tap weights (kw wrap folded in)
       b_ref : (1, W*Cout) lane-dense tiled bias
       returns (bb*H, W*Cout) f32
    """
    bb, H, WCin = x3.shape
    # Circular pad along H only (the W wrap lives inside the tap weights).
    xp = jnp.concatenate([x3[:, H - PAD:, :], x3, x3[:, :PAD, :]], axis=1)
    acc = None
    for kh in range(KS):                      # 5 MXU matmuls, K = W*Cin
        lhs = xp[:, kh:kh + H, :].reshape(bb * H, WCin)
        part = jnp.dot(lhs, w_ref[kh], preferred_element_type=jnp.float32)
        acc = part if acc is None else acc + part
    return acc + b_ref[...]                   # full-lane-width vadd


# ----------------------------------------------------------------------------
# Fused kernel: conv->lrelu->conv->lrelu->conv->tanh for the whole batch block
# ----------------------------------------------------------------------------
def _patemb_kernel(x_ref, w0_ref, b0_ref, w1_ref, b1_ref, w2_ref, b2_ref, o_ref):
    bb, H, W = x_ref.shape                    # first layer: Cin = 1, slab = (bb, H, W)
    y = _conv5x5_circular_lanedense(x_ref[...].astype(jnp.float32), w0_ref, b0_ref)
    y = jnp.where(y >= 0, y, NEG_SLOPE * y)

    y = _conv5x5_circular_lanedense(y.reshape(bb, H, -1), w1_ref, b1_ref)
    y = jnp.where(y >= 0, y, NEG_SLOPE * y)

    y = _conv5x5_circular_lanedense(y.reshape(bb, H, -1), w2_ref, b2_ref)
    y = jnp.tanh(y)

    o_ref[...] = y.astype(o_ref.dtype)        # (bb*H, W*C) lane-dense store


# ----------------------------------------------------------------------------
# Parameters (HWIO conv weights, PyTorch-style init ranges)
# ----------------------------------------------------------------------------
def init_patemb_params(key, in_pat_c, n_layers=N_LAYERS):
    hidden = in_pat_c
    params = []
    for i in range(n_layers):
        cin = 1 if i == 0 else hidden
        key, kw_key, kb_key = jax.random.split(key, 3)
        bound = 1.0 / math.sqrt(cin * KS * KS)
        w = jax.random.uniform(kw_key, (KS, KS, cin, hidden), jnp.float32, -bound, bound)
        b = jax.random.uniform(kb_key, (hidden,), jnp.float32, -bound, bound)
        params.append((w, b))
    return params


# ----------------------------------------------------------------------------
# One-time host-side layout plumbing:
#   HWIO (KS,KS,Cin,Cout) -> 5 block-circulant taps (KS, W*Cin, W*Cout)
#   bias (Cout,)          -> lane-dense (1, W*Cout)
# ----------------------------------------------------------------------------
def prepare_block_weights(params, W):
    prepared = []
    for (w_hwio, b) in params:
        w_np = np.asarray(w_hwio, np.float32)
        b_np = np.asarray(b, np.float32)
        ks, _, cin, cout = w_np.shape
        blk = np.zeros((ks, W * cin, W * cout), np.float32)
        for kh in range(ks):
            for kw in range(ks):
                for wo in range(W):
                    wi = (wo + kw - PAD) % W          # circular W wrap, folded in
                    blk[kh, wi * cin:(wi + 1) * cin, wo * cout:(wo + 1) * cout] += w_np[kh, kw]
        bias = np.tile(b_np.reshape(1, 1, cout), (1, W, 1)).reshape(1, W * cout)
        prepared.append((jnp.asarray(blk), jnp.asarray(bias)))
    return prepared


# ----------------------------------------------------------------------------
# Forward (Pallas), NCHW in / NCHW out like the PyTorch module
# ----------------------------------------------------------------------------
@jax.jit
def patemb_forward(prepared, x_nchw):
    B, Cin0, H, W = x_nchw.shape
    assert Cin0 == 1, "first conv layer has in_channels=1"
    x = x_nchw.reshape(B, H, W).astype(jnp.float32)       # free reshape (C=1)

    (w0, b0), (w1, b1), (w2, b2) = prepared
    hidden = b2.shape[-1] // W
    bb = B                                                # fold full batch into M

    out = pl.pallas_call(
        _patemb_kernel,
        out_shape=jax.ShapeDtypeStruct((B * H, W * hidden), jnp.float32),
        grid_spec=pltpu.PrefetchScalarGridSpec(
            num_scalar_prefetch=0,
            grid=(pl.cdiv(B, bb),),
            in_specs=[
                pl.BlockSpec((bb, H, W), lambda i: (i, 0, 0)),
                pl.BlockSpec(w0.shape, lambda i: (0, 0, 0)),
                pl.BlockSpec(b0.shape, lambda i: (0, 0)),
                pl.BlockSpec(w1.shape, lambda i: (0, 0, 0)),
                pl.BlockSpec(b1.shape, lambda i: (0, 0)),
                pl.BlockSpec(w2.shape, lambda i: (0, 0, 0)),
                pl.BlockSpec(b2.shape, lambda i: (0, 0)),
            ],
            out_specs=pl.BlockSpec((bb * H, W * hidden), lambda i: (i, 0)),
        ),
        compiler_params=pltpu.CompilerParams(
            dimension_semantics=("parallel",)),
    )(x, w0, b0, w1, b1, w2, b2)

    # Tiny (16 KiB) layout fix back to NCHW; kept outside the kernel for robustness.
    out = out.reshape(B, H, W, hidden)
    return jnp.transpose(out, (0, 3, 1, 2))


# ----------------------------------------------------------------------------
# Pure-JAX reference (mirrors the PyTorch forward) for verification
# ----------------------------------------------------------------------------
def patemb_reference(params, x_nchw):
    x = jnp.transpose(x_nchw, (0, 2, 3, 1)).astype(jnp.float32)
    n = len(params)
    for i, (wv, bv) in enumerate(params):
        xp = jnp.pad(x, ((0, 0), (PAD, PAD), (PAD, PAD), (0, 0)), mode='wrap')
        y = lax.conv_general_dilated(
            xp, wv, (1, 1), 'VALID',
            dimension_numbers=('NHWC', 'HWIO', 'NHWC')) + bv.reshape(1, 1, 1, -1)
        if i != n - 1:
            x = jnp.where(y >= 0, y, NEG_SLOPE * y)
        else:
            x = jnp.tanh(y)
    return jnp.transpose(x, (0, 3, 1, 2))


if __name__ == "__main__":
    key = jax.random.PRNGKey(0)
    kp, kx = jax.random.split(key)

    B, in_pat_c, H, W = 2, 8, 16, 16          # hidden_dim = in_pat_c = 8; W*C = 128
    params = init_patemb_params(kp, in_pat_c, n_layers=N_LAYERS)
    prepared = prepare_block_weights(params, W)
    x = jax.random.normal(kx, (B, 1, H, W), jnp.float32)

    out = jax.block_until_ready(patemb_forward(prepared, x))
    assert out.shape == (B, in_pat_c, H, W), out.shape

    ref = jax.block_until_ready(patemb_reference(params, x))
    np.testing.assert_allclose(np.asarray(out), np.asarray(ref), rtol=1e-5, atol=1e-5)

    print("KERNEL_OK")
</pallas_src>

<mosaic_0001>
module attributes {stable_mosaic.version = 11 : i64} {
  func.func @_patemb_kernel(%arg0: i32, %arg1: memref<2x16x16xf32, #tpu.memory_space<vmem>>, %arg2: memref<5x16x128xf32, #tpu.memory_space<vmem>>, %arg3: memref<1x128xf32, #tpu.memory_space<vmem>>, %arg4: memref<5x128x128xf32, #tpu.memory_space<vmem>>, %arg5: memref<1x128xf32, #tpu.memory_space<vmem>>, %arg6: memref<5x128x128xf32, #tpu.memory_space<vmem>>, %arg7: memref<1x128xf32, #tpu.memory_space<vmem>>, %arg8: memref<32x128xf32, #tpu.memory_space<vmem>>) attributes {dimension_semantics = [#tpu.dimension_semantics<parallel>], iteration_bounds = array<i64: 1>, scalar_prefetch = 0 : i64, scratch_operands = 0 : i64, tpu.core_type = #tpu.core_type<tc>, window_params = [{transform_indices = @transform_0, window_bounds = array<i64: 2, 16, 16>}, {pipeline_mode = #tpu.pipeline_mode<synchronous>, transform_indices = @transform_1, window_bounds = array<i64: 5, 16, 128>}, {pipeline_mode = #tpu.pipeline_mode<synchronous>, transform_indices = @transform_2, window_bounds = array<i64: 1, 128>}, {pipeline_mode = #tpu.pipeline_mode<synchronous>, transform_indices = @transform_3, window_bounds = array<i64: 5, 128, 128>}, {pipeline_mode = #tpu.pipeline_mode<synchronous>, transform_indices = @transform_4, window_bounds = array<i64: 1, 128>}, {pipeline_mode = #tpu.pipeline_mode<synchronous>, transform_indices = @transform_5, window_bounds = array<i64: 5, 128, 128>}, {pipeline_mode = #tpu.pipeline_mode<synchronous>, transform_indices = @transform_6, window_bounds = array<i64: 1, 128>}, {transform_indices = @transform_7, window_bounds = array<i64: 32, 128>}]} {
    %c0 = arith.constant 0 : index
    %c0_0 = arith.constant 0 : index
    %c0_1 = arith.constant 0 : index
    %0 = vector.load %arg1[%c0, %c0_0, %c0_1] : memref<2x16x16xf32, #tpu.memory_space<vmem>>, vector<2x16x16xf32>
    %1 = vector.extract_strided_slice %0 {offsets = [0, 14, 0], sizes = [2, 2, 16], strides = [1, 1, 1]} : vector<2x16x16xf32> to vector<2x2x16xf32>
    %2 = vector.extract_strided_slice %0 {offsets = [0, 0, 0], sizes = [2, 2, 16], strides = [1, 1, 1]} : vector<2x16x16xf32> to vector<2x2x16xf32>
    %3 = tpu.concatenate %1, %0, %2 in 1 : vector<2x2x16xf32>, vector<2x16x16xf32>, vector<2x2x16xf32> -> vector<2x20x16xf32>
    %4 = vector.extract_strided_slice %3 {offsets = [0, 0, 0], sizes = [2, 16, 16], strides = [1, 1, 1]} : vector<2x20x16xf32> to vector<2x16x16xf32>
    %5 = vector.shape_cast %4 : vector<2x16x16xf32> to vector<32x16xf32>
    %c0_2 = arith.constant 0 : index
    %c0_3 = arith.constant 0 : index
    %c0_4 = arith.constant 0 : index
    %6 = vector.load %arg2[%c0_2, %c0_3, %c0_4] : memref<5x16x128xf32, #tpu.memory_space<vmem>>, vector<1x16x128xf32>
    %7 = vector.shape_cast %6 : vector<1x16x128xf32> to vector<16x128xf32>
    %cst = arith.constant dense<0.000000e+00> : vector<32x128xf32>
    %8 = tpu.matmul %5, %7, %cst {dimension_numbers = #tpu.dot_dimension_numbers<[1], [0], [0], [1], [0, 0, 1, 1], [], []>} : vector<32x16xf32>, vector<16x128xf32>, vector<32x128xf32> -> vector<32x128xf32>
    %9 = vector.extract_strided_slice %3 {offsets = [0, 1, 0], sizes = [2, 16, 16], strides = [1, 1, 1]} : vector<2x20x16xf32> to vector<2x16x16xf32>
    %10 = vector.shape_cast %9 : vector<2x16x16xf32> to vector<32x16xf32>
    %c1 = arith.constant 1 : index
    %c0_5 = arith.constant 0 : index
    %c0_6 = arith.constant 0 : index
    %11 = vector.load %arg2[%c1, %c0_5, %c0_6] : memref<5x16x128xf32, #tpu.memory_space<vmem>>, vector<1x16x128xf32>
    %12 = vector.shape_cast %11 : vector<1x16x128xf32> to vector<16x128xf32>
    %cst_7 = arith.constant dense<0.000000e+00> : vector<32x128xf32>
    %13 = tpu.matmul %10, %12, %cst_7 {dimension_numbers = #tpu.dot_dimension_numbers<[1], [0], [0], [1], [0, 0, 1, 1], [], []>} : vector<32x16xf32>, vector<16x128xf32>, vector<32x128xf32> -> vector<32x128xf32>
    %14 = arith.addf %8, %13 : vector<32x128xf32>
    %15 = vector.extract_strided_slice %3 {offsets = [0, 2, 0], sizes = [2, 16, 16], strides = [1, 1, 1]} : vector<2x20x16xf32> to vector<2x16x16xf32>
    %16 = vector.shape_cast %15 : vector<2x16x16xf32> to vector<32x16xf32>
    %c2 = arith.constant 2 : index
    %c0_8 = arith.constant 0 : index
    %c0_9 = arith.constant 0 : index
    %17 = vector.load %arg2[%c2, %c0_8, %c0_9] : memref<5x16x128xf32, #tpu.memory_space<vmem>>, vector<1x16x128xf32>
    %18 = vector.shape_cast %17 : vector<1x16x128xf32> to vector<16x128xf32>
    %cst_10 = arith.constant dense<0.000000e+00> : vector<32x128xf32>
    %19 = tpu.matmul %16, %18, %cst_10 {dimension_numbers = #tpu.dot_dimension_numbers<[1], [0], [0], [1], [0, 0, 1, 1], [], []>} : vector<32x16xf32>, vector<16x128xf32>, vector<32x128xf32> -> vector<32x128xf32>
    %20 = arith.addf %14, %19 : vector<32x128xf32>
    %21 = vector.extract_strided_slice %3 {offsets = [0, 3, 0], sizes = [2, 16, 16], strides = [1, 1, 1]} : vector<2x20x16xf32> to vector<2x16x16xf32>
    %22 = vector.shape_cast %21 : vector<2x16x16xf32> to vector<32x16xf32>
    %c3 = arith.constant 3 : index
    %c0_11 = arith.constant 0 : index
    %c0_12 = arith.constant 0 : index
    %23 = vector.load %arg2[%c3, %c0_11, %c0_12] : memref<5x16x128xf32, #tpu.memory_space<vmem>>, vector<1x16x128xf32>
    %24 = vector.shape_cast %23 : vector<1x16x128xf32> to vector<16x128xf32>
    %cst_13 = arith.constant dense<0.000000e+00> : vector<32x128xf32>
    %25 = tpu.matmul %22, %24, %cst_13 {dimension_numbers = #tpu.dot_dimension_numbers<[1], [0], [0], [1], [0, 0, 1, 1], [], []>} : vector<32x16xf32>, vector<16x128xf32>, vector<32x128xf32> -> vector<32x128xf32>
    %26 = arith.addf %20, %25 : vector<32x128xf32>
    %27 = vector.extract_strided_slice %3 {offsets = [0, 4, 0], sizes = [2, 16, 16], strides = [1, 1, 1]} : vector<2x20x16xf32> to vector<2x16x16xf32>
    %28 = vector.shape_cast %27 : vector<2x16x16xf32> to vector<32x16xf32>
    %c4 = arith.constant 4 : index
    %c0_14 = arith.constant 0 : index
    %c0_15 = arith.constant 0 : index
    %29 = vector.load %arg2[%c4, %c0_14, %c0_15] : memref<5x16x128xf32, #tpu.memory_space<vmem>>, vector<1x16x128xf32>
    %30 = vector.shape_cast %29 : vector<1x16x128xf32> to vector<16x128xf32>
    %cst_16 = arith.constant dense<0.000000e+00> : vector<32x128xf32>
    %31 = tpu.matmul %28, %30, %cst_16 {dimension_numbers = #tpu.dot_dimension_numbers<[1], [0], [0], [1], [0, 0, 1, 1], [], []>} : vector<32x16xf32>, vector<16x128xf32>, vector<32x128xf32> -> vector<32x128xf32>
    %32 = arith.addf %26, %31 : vector<32x128xf32>
    %c0_17 = arith.constant 0 : index
    %c0_18 = arith.constant 0 : index
    %33 = vector.load %arg3[%c0_17, %c0_18] : memref<1x128xf32, #tpu.memory_space<vmem>>, vector<1x128xf32>
    %34 = vector.broadcast %33 : vector<1x128xf32> to vector<32x128xf32>
    %35 = arith.addf %32, %34 : vector<32x128xf32>
    %cst_19 = arith.constant 0.000000e+00 : f32
    %36 = vector.broadcast %cst_19 : f32 to vector<32x128xf32>
    %37 = arith.cmpf oge, %35, %36 : vector<32x128xf32>
    %cst_20 = arith.constant 0.00999999977 : f32
    %38 = vector.broadcast %cst_20 : f32 to vector<32x128xf32>
    %39 = arith.mulf %38, %35 : vector<32x128xf32>
    %40 = arith.select %37, %35, %39 : vector<32x128xi1>, vector<32x128xf32>
    %41 = vector.shape_cast %40 : vector<32x128xf32> to vector<2x16x128xf32>
    %42 = vector.extract_strided_slice %41 {offsets = [0, 14, 0], sizes = [2, 2, 128], strides = [1, 1, 1]} : vector<2x16x128xf32> to vector<2x2x128xf32>
    %43 = vector.extract_strided_slice %41 {offsets = [0, 0, 0], sizes = [2, 2, 128], strides = [1, 1, 1]} : vector<2x16x128xf32> to vector<2x2x128xf32>
    %44 = tpu.concatenate %42, %41, %43 in 1 : vector<2x2x128xf32>, vector<2x16x128xf32>, vector<2x2x128xf32> -> vector<2x20x128xf32>
    %45 = vector.extract_strided_slice %44 {offsets = [0, 0, 0], sizes = [2, 16, 128], strides = [1, 1, 1]} : vector<2x20x128xf32> to vector<2x16x128xf32>
    %46 = vector.shape_cast %45 : vector<2x16x128xf32> to vector<32x128xf32>
    %c0_21 = arith.constant 0 : index
    %c0_22 = arith.constant 0 : index
    %c0_23 = arith.constant 0 : index
    %47 = vector.load %arg4[%c0_21, %c0_22, %c0_23] : memref<5x128x128xf32, #tpu.memory_space<vmem>>, vector<1x128x128xf32>
    %48 = vector.shape_cast %47 : vector<1x128x128xf32> to vector<128x128xf32>
    %cst_24 = arith.constant dense<0.000000e+00> : vector<32x128xf32>
    %49 = tpu.matmul %46, %48, %cst_24 {dimension_numbers = #tpu.dot_dimension_numbers<[1], [0], [0], [1], [0, 0, 1, 1], [], []>} : vector<32x128xf32>, vector<128x128xf32>, vector<32x128xf32> -> vector<32x128xf32>
    %50 = vector.extract_strided_slice %44 {offsets = [0, 1, 0], sizes = [2, 16, 128], strides = [1, 1, 1]} : vector<2x20x128xf32> to vector<2x16x128xf32>
    %51 = vector.shape_cast %50 : vector<2x16x128xf32> to vector<32x128xf32>
    %c1_25 = arith.constant 1 : index
    %c0_26 = arith.constant 0 : index
    %c0_27 = arith.constant 0 : index
    %52 = vector.load %arg4[%c1_25, %c0_26, %c0_27] : memref<5x128x128xf32, #tpu.memory_space<vmem>>, vector<1x128x128xf32>
    %53 = vector.shape_cast %52 : vector<1x128x128xf32> to vector<128x128xf32>
    %cst_28 = arith.constant dense<0.000000e+00> : vector<32x128xf32>
    %54 = tpu.matmul %51, %53, %cst_28 {dimension_numbers = #tpu.dot_dimension_numbers<[1], [0], [0], [1], [0, 0, 1, 1], [], []>} : vector<32x128xf32>, vector<128x128xf32>, vector<32x128xf32> -> vector<32x128xf32>
    %55 = arith.addf %49, %54 : vector<32x128xf32>
    %56 = vector.extract_strided_slice %44 {offsets = [0, 2, 0], sizes = [2, 16, 128], strides = [1, 1, 1]} : vector<2x20x128xf32> to vector<2x16x128xf32>
    %57 = vector.shape_cast %56 : vector<2x16x128xf32> to vector<32x128xf32>
    %c2_29 = arith.constant 2 : index
    %c0_30 = arith.constant 0 : index
    %c0_31 = arith.constant 0 : index
    %58 = vector.load %arg4[%c2_29, %c0_30, %c0_31] : memref<5x128x128xf32, #tpu.memory_space<vmem>>, vector<1x128x128xf32>
    %59 = vector.shape_cast %58 : vector<1x128x128xf32> to vector<128x128xf32>
    %cst_32 = arith.constant dense<0.000000e+00> : vector<32x128xf32>
    %60 = tpu.matmul %57, %59, %cst_32 {dimension_numbers = #tpu.dot_dimension_numbers<[1], [0], [0], [1], [0, 0, 1, 1], [], []>} : vector<32x128xf32>, vector<128x128xf32>, vector<32x128xf32> -> vector<32x128xf32>
    %61 = arith.addf %55, %60 : vector<32x128xf32>
    %62 = vector.extract_strided_slice %44 {offsets = [0, 3, 0], sizes = [2, 16, 128], strides = [1, 1, 1]} : vector<2x20x128xf32> to vector<2x16x128xf32>
    %63 = vector.shape_cast %62 : vector<2x16x128xf32> to vector<32x128xf32>
    %c3_33 = arith.constant 3 : index
    %c0_34 = arith.constant 0 : index
    %c0_35 = arith.constant 0 : index
    %64 = vector.load %arg4[%c3_33, %c0_34, %c0_35] : memref<5x128x128xf32, #tpu.memory_space<vmem>>, vector<1x128x128xf32>
    %65 = vector.shape_cast %64 : vector<1x128x128xf32> to vector<128x128xf32>
    %cst_36 = arith.constant dense<0.000000e+00> : vector<32x128xf32>
    %66 = tpu.matmul %63, %65, %cst_36 {dimension_numbers = #tpu.dot_dimension_numbers<[1], [0], [0], [1], [0, 0, 1, 1], [], []>} : vector<32x128xf32>, vector<128x128xf32>, vector<32x128xf32> -> vector<32x128xf32>
    %67 = arith.addf %61, %66 : vector<32x128xf32>
    %68 = vector.extract_strided_slice %44 {offsets = [0, 4, 0], sizes = [2, 16, 128], strides = [1, 1, 1]} : vector<2x20x128xf32> to vector<2x16x128xf32>
    %69 = vector.shape_cast %68 : vector<2x16x128xf32> to vector<32x128xf32>
    %c4_37 = arith.constant 4 : index
    %c0_38 = arith.constant 0 : index
    %c0_39 = arith.constant 0 : index
    %70 = vector.load %arg4[%c4_37, %c0_38, %c0_39] : memref<5x128x128xf32, #tpu.memory_space<vmem>>, vector<1x128x128xf32>
    %71 = vector.shape_cast %70 : vector<1x128x128xf32> to vector<128x128xf32>
    %cst_40 = arith.constant dense<0.000000e+00> : vector<32x128xf32>
    %72 = tpu.matmul %69, %71, %cst_40 {dimension_numbers = #tpu.dot_dimension_numbers<[1], [0], [0], [1], [0, 0, 1, 1], [], []>} : vector<32x128xf32>, vector<128x128xf32>, vector<32x128xf32> -> vector<32x128xf32>
    %73 = arith.addf %67, %72 : vector<32x128xf32>
    %c0_41 = arith.constant 0 : index
    %c0_42 = arith.constant 0 : index
    %74 = vector.load %arg5[%c0_41, %c0_42] : memref<1x128xf32, #tpu.memory_space<vmem>>, vector<1x128xf32>
    %75 = vector.broadcast %74 : vector<1x128xf32> to vector<32x128xf32>
    %76 = arith.addf %73, %75 : vector<32x128xf32>
    %cst_43 = arith.constant 0.000000e+00 : f32
    %77 = vector.broadcast %cst_43 : f32 to vector<32x128xf32>
    %78 = arith.cmpf oge, %76, %77 : vector<32x128xf32>
    %cst_44 = arith.constant 0.00999999977 : f32
    %79 = vector.broadcast %cst_44 : f32 to vector<32x128xf32>
    %80 = arith.mulf %79, %76 : vector<32x128xf32>
    %81 = arith.select %78, %76, %80 : vector<32x128xi1>, vector<32x128xf32>
    %82 = vector.shape_cast %81 : vector<32x128xf32> to vector<2x16x128xf32>
    %83 = vector.extract_strided_slice %82 {offsets = [0, 14, 0], sizes = [2, 2, 128], strides = [1, 1, 1]} : vector<2x16x128xf32> to vector<2x2x128xf32>
    %84 = vector.extract_strided_slice %82 {offsets = [0, 0, 0], sizes = [2, 2, 128], strides = [1, 1, 1]} : vector<2x16x128xf32> to vector<2x2x128xf32>
    %85 = tpu.concatenate %83, %82, %84 in 1 : vector<2x2x128xf32>, vector<2x16x128xf32>, vector<2x2x128xf32> -> vector<2x20x128xf32>
    %86 = vector.extract_strided_slice %85 {offsets = [0, 0, 0], sizes = [2, 16, 128], strides = [1, 1, 1]} : vector<2x20x128xf32> to vector<2x16x128xf32>
    %87 = vector.shape_cast %86 : vector<2x16x128xf32> to vector<32x128xf32>
    %c0_45 = arith.constant 0 : index
    %c0_46 = arith.constant 0 : index
    %c0_47 = arith.constant 0 : index
    %88 = vector.load %arg6[%c0_45, %c0_46, %c0_47] : memref<5x128x128xf32, #tpu.memory_space<vmem>>, vector<1x128x128xf32>
    %89 = vector.shape_cast %88 : vector<1x128x128xf32> to vector<128x128xf32>
    %cst_48 = arith.constant dense<0.000000e+00> : vector<32x128xf32>
    %90 = tpu.matmul %87, %89, %cst_48 {dimension_numbers = #tpu.dot_dimension_numbers<[1], [0], [0], [1], [0, 0, 1, 1], [], []>} : vector<32x128xf32>, vector<128x128xf32>, vector<32x128xf32> -> vector<32x128xf32>
    %91 = vector.extract_strided_slice %85 {offsets = [0, 1, 0], sizes = [2, 16, 128], strides = [1, 1, 1]} : vector<2x20x128xf32> to vector<2x16x128xf32>
    %92 = vector.shape_cast %91 : vector<2x16x128xf32> to vector<32x128xf32>
    %c1_49 = arith.constant 1 : index
    %c0_50 = arith.constant 0 : index
    %c0_51 = arith.constant 0 : index
    %93 = vector.load %arg6[%c1_49, %c0_50, %c0_51] : memref<5x128x128xf32, #tpu.memory_space<vmem>>, vector<1x128x128xf32>
    %94 = vector.shape_cast %93 : vector<1x128x128xf32> to vector<128x128xf32>
    %cst_52 = arith.constant dense<0.000000e+00> : vector<32x128xf32>
    %95 = tpu.matmul %92, %94, %cst_52 {dimension_numbers = #tpu.dot_dimension_numbers<[1], [0], [0], [1], [0, 0, 1, 1], [], []>} : vector<32x128xf32>, vector<128x128xf32>, vector<32x128xf32> -> vector<32x128xf32>
    %96 = arith.addf %90, %95 : vector<32x128xf32>
    %97 = vector.extract_strided_slice %85 {offsets = [0, 2, 0], sizes = [2, 16, 128], strides = [1, 1, 1]} : vector<2x20x128xf32> to vector<2x16x128xf32>
    %98 = vector.shape_cast %97 : vector<2x16x128xf32> to vector<32x128xf32>
    %c2_53 = arith.constant 2 : index
    %c0_54 = arith.constant 0 : index
    %c0_55 = arith.constant 0 : index
    %99 = vector.load %arg6[%c2_53, %c0_54, %c0_55] : memref<5x128x128xf32, #tpu.memory_space<vmem>>, vector<1x128x128xf32>
    %100 = vector.shape_cast %99 : vector<1x128x128xf32> to vector<128x128xf32>
    %cst_56 = arith.constant dense<0.000000e+00> : vector<32x128xf32>
    %101 = tpu.matmul %98, %100, %cst_56 {dimension_numbers = #tpu.dot_dimension_numbers<[1], [0], [0], [1], [0, 0, 1, 1], [], []>} : vector<32x128xf32>, vector<128x128xf32>, vector<32x128xf32> -> vector<32x128xf32>
    %102 = arith.addf %96, %101 : vector<32x128xf32>
    %103 = vector.extract_strided_slice %85 {offsets = [0, 3, 0], sizes = [2, 16, 128], strides = [1, 1, 1]} : vector<2x20x128xf32> to vector<2x16x128xf32>
    %104 = vector.shape_cast %103 : vector<2x16x128xf32> to vector<32x128xf32>
    %c3_57 = arith.constant 3 : index
    %c0_58 = arith.constant 0 : index
    %c0_59 = arith.constant 0 : index
    %105 = vector.load %arg6[%c3_57, %c0_58, %c0_59] : memref<5x128x128xf32, #tpu.memory_space<vmem>>, vector<1x128x128xf32>
    %106 = vector.shape_cast %105 : vector<1x128x128xf32> to vector<128x128xf32>
    %cst_60 = arith.constant dense<0.000000e+00> : vector<32x128xf32>
    %107 = tpu.matmul %104, %106, %cst_60 {dimension_numbers = #tpu.dot_dimension_numbers<[1], [0], [0], [1], [0, 0, 1, 1], [], []>} : vector<32x128xf32>, vector<128x128xf32>, vector<32x128xf32> -> vector<32x128xf32>
    %108 = arith.addf %102, %107 : vector<32x128xf32>
    %109 = vector.extract_strided_slice %85 {offsets = [0, 4, 0], sizes = [2, 16, 128], strides = [1, 1, 1]} : vector<2x20x128xf32> to vector<2x16x128xf32>
    %110 = vector.shape_cast %109 : vector<2x16x128xf32> to vector<32x128xf32>
    %c4_61 = arith.constant 4 : index
    %c0_62 = arith.constant 0 : index
    %c0_63 = arith.constant 0 : index
    %111 = vector.load %arg6[%c4_61, %c0_62, %c0_63] : memref<5x128x128xf32, #tpu.memory_space<vmem>>, vector<1x128x128xf32>
    %112 = vector.shape_cast %111 : vector<1x128x128xf32> to vector<128x128xf32>
    %cst_64 = arith.constant dense<0.000000e+00> : vector<32x128xf32>
    %113 = tpu.matmul %110, %112, %cst_64 {dimension_numbers = #tpu.dot_dimension_numbers<[1], [0], [0], [1], [0, 0, 1, 1], [], []>} : vector<32x128xf32>, vector<128x128xf32>, vector<32x128xf32> -> vector<32x128xf32>
    %114 = arith.addf %108, %113 : vector<32x128xf32>
    %c0_65 = arith.constant 0 : index
    %c0_66 = arith.constant 0 : index
    %115 = vector.load %arg7[%c0_65, %c0_66] : memref<1x128xf32, #tpu.memory_space<vmem>>, vector<1x128xf32>
    %116 = vector.broadcast %115 : vector<1x128xf32> to vector<32x128xf32>
    %117 = arith.addf %114, %116 : vector<32x128xf32>
    %118 = math.tanh %117 : vector<32x128xf32>
    %c0_67 = arith.constant 0 : index
    %c0_68 = arith.constant 0 : index
    %119 = vector.load %arg8[%c0_67, %c0_68] : memref<32x128xf32, #tpu.memory_space<vmem>>, vector<32x128xf32>
    tpu.vector_store %arg8[%c0_67, %c0_68], %118 {strides = array<i32>} : memref<32x128xf32, #tpu.memory_space<vmem>>, vector<32x128xf32>,
    return
  }
  func.func @transform_0(%arg0: i32) -> (i32, i32, i32) {
    %c0_i32 = arith.constant 0 : i32
    %c0_i32_0 = arith.constant 0 : i32
    %c0_i32_1 = arith.constant 0 : i32
    return %arg0, %c0_i32, %c0_i32_0 : i32, i32, i32
  }
  func.func @transform_1(%arg0: i32) -> (i32, i32, i32) {
    %c0_i32 = arith.constant 0 : i32
    %c0_i32_0 = arith.constant 0 : i32
    %c0_i32_1 = arith.constant 0 : i32
    %c0_i32_2 = arith.constant 0 : i32
    return %c0_i32, %c0_i32_0, %c0_i32_1 : i32, i32, i32
  }
  func.func @transform_2(%arg0: i32) -> (i32, i32) {
    %c0_i32 = arith.constant 0 : i32
    %c0_i32_0 = arith.constant 0 : i32
    %c0_i32_1 = arith.constant 0 : i32
    return %c0_i32, %c0_i32_0 : i32, i32
  }
  func.func @transform_3(%arg0: i32) -> (i32, i32, i32) {
    %c0_i32 = arith.constant 0 : i32
    %c0_i32_0 = arith.constant 0 : i32
    %c0_i32_1 = arith.constant 0 : i32
    %c0_i32_2 = arith.constant 0 : i32
    return %c0_i32, %c0_i32_0, %c0_i32_1 : i32, i32, i32
  }
  func.func @transform_4(%arg0: i32) -> (i32, i32) {
    %c0_i32 = arith.constant 0 : i32
    %c0_i32_0 = arith.constant 0 : i32
    %c0_i32_1 = arith.constant 0 : i32
    return %c0_i32, %c0_i32_0 : i32, i32
  }
  func.func @transform_5(%arg0: i32) -> (i32, i32, i32) {
    %c0_i32 = arith.constant 0 : i32
    %c0_i32_0 = arith.constant 0 : i32
    %c0_i32_1 = arith.constant 0 : i32
    %c0_i32_2 = arith.constant 0 : i32
    return %c0_i32, %c0_i32_0, %c0_i32_1 : i32, i32, i32
  }
  func.func @transform_6(%arg0: i32) -> (i32, i32) {
    %c0_i32 = arith.constant 0 : i32
    %c0_i32_0 = arith.constant 0 : i32
    %c0_i32_1 = arith.constant 0 : i32
    return %c0_i32, %c0_i32_0 : i32, i32
  }
  func.func @transform_7(%arg0: i32) -> (i32, i32) {
    %c0_i32 = arith.constant 0 : i32
    %c0_i32_0 = arith.constant 0 : i32
    return %arg0, %c0_i32 : i32, i32
  }
}

</mosaic_0001>

<llo_original>
// kernel: patemb_forward.1
$region0: #{patemb_forward.1}
  #allocation0 [shape = 'u32[]', space=smem, size = 0x4, offset = 0x4, fixed_abs, tag = 'smem constant byte address 0x4 - core index']
  #allocation1 [shape = 'u32[144,128]{1,0:T(1,128)}', space=vmem, size = 0x12000, scoped, tag = 'internal scratch']
  %s0 = inlined_call_operand.hbm [shape: f32[2,16,16], index: 0, kind: input, shape index: {}]
  %s1 = inlined_call_operand.hbm [shape: f32[5,16,128], index: 1, kind: input, shape index: {}]
  %s2 = inlined_call_operand.vmem [shape: f32[1,128], index: 2, kind: input, shape index: {}]
  %s3 = inlined_call_operand.hbm [shape: f32[5,128,128], index: 3, kind: input, shape index: {}]
  %s4 = inlined_call_operand.vmem [shape: f32[1,128], index: 4, kind: input, shape index: {}]
  %s5 = inlined_call_operand.hbm [shape: f32[5,128,128], index: 5, kind: input, shape index: {}]
  %s6 = inlined_call_operand.vmem [shape: f32[1,128], index: 6, kind: input, shape index: {}]
  %s7 = inlined_call_operand.vmem [shape: f32[32,128], index: 7, kind: output, shape index: {}]
  %s8 = sld [smem:[#allocation0]]
  $region54: #{patemb_forward.1} parent=0
    _
  %s10 = ssub.s32 1, %s8
  %s11 = scalar_select 0, %s10, %s8
  $region1: #{patemb_forward.1} parent=0
    #allocation2 [shape = 'u8[16384]{0}', space=vmem, size = 0x4000, scoped, tag = 'input window, operand 0, single buffered']
    #allocation3 [shape = 's32[1]{0}', space=sflag, size = 0x4, scoped, tag = 'scoped memory for patemb_forward.1']
    #allocation4 [shape = 'u8[40960]{0}', space=vmem, size = 0xa000, scoped, tag = 'input window, operand 1, single buffered']
    #allocation5 [shape = 's32[1]{0}', space=sflag, size = 0x4, scoped, tag = 'scoped memory for patemb_forward.1']
    #allocation6 [shape = 'u8[327680]{0}', space=vmem, size = 0x50000, scoped, tag = 'input window, operand 3, single buffered']
    #allocation7 [shape = 'u8[327680]{0}', space=vmem, size = 0x50000, scoped, tag = 'input window, operand 5, single buffered']
    #allocation8 [shape = 's32[1]{0}', space=sflag, size = 0x4, scoped, tag = 'scoped memory for patemb_forward.1']
    %12 = vsyncpa [#allocation3], 0
    %13 = vsyncpa [#allocation5], 0
    %14 = vsyncpa [#allocation8], 0
    // Predicated region
    $region2: #{patemb_forward.1} parent=1 // pred_check
      _
    $region3: #{patemb_forward.1} parent=1 // pred_check_branch
      %16 = sbr.rel (0) target = $region5
    $region4: #{patemb_forward.1} parent=1 // pred_region
      %s18 = ssub.s32 512, 512
      %19 = vsyncadd [#allocation3], %s18
      %s20 = sshll.u32 [#allocation2], 4
      %s21 = int_to_ptr.vmem [resolvable:$true] %s20
      %26 = dma.hbm_to_vmem [thread:$0]  %s0, 512, %s21, [#allocation3], 128, 128, 8
    $region5: #{patemb_forward.1} parent=1 // pred_fallthru
      _
    // Predicated region
    $region6: #{patemb_forward.1} parent=1 // pred_check
      _
    $region7: #{patemb_forward.1} parent=1 // pred_check_branch
      %28 = sbr.rel (0) target = $region9
    $region8: #{patemb_forward.1} parent=1 // pred_region
      %s30 = ssub.s32 1280, 1280
      %31 = vsyncadd [#allocation5], %s30
      %s32 = sshll.u32 [#allocation4], 4
      %s33 = int_to_ptr.vmem [resolvable:$true] %s32
      %38 = dma.hbm_to_vmem [thread:$0]  %s1, 1280, %s33, [#allocation5], 128, 128, 8
    $region9: #{patemb_forward.1} parent=1 // pred_fallthru
      _
    // Predicated region
    $region10: #{patemb_forward.1} parent=1 // pred_check
      _
    $region11: #{patemb_forward.1} parent=1 // pred_check_branch
      %40 = sbr.rel (0) target = $region13
    $region12: #{patemb_forward.1} parent=1 // pred_region
      _
    $region13: #{patemb_forward.1} parent=1 // pred_fallthru
      _
    // Predicated region
    $region14: #{patemb_forward.1} parent=1 // pred_check
      _
    $region15: #{patemb_forward.1} parent=1 // pred_check_branch
      %42 = sbr.rel (0) target = $region17
    $region16: #{patemb_forward.1} parent=1 // pred_region
      %s44 = ssub.s32 10240, 10240
      %45 = vsyncadd [#allocation5], %s44
      %s46 = sshll.u32 [#allocation6], 4
      %s47 = int_to_ptr.vmem [resolvable:$true] %s46
      %52 = dma.hbm_to_vmem [thread:$0]  %s3, 10240, %s47, [#allocation5], 128, 128, 8
    $region17: #{patemb_forward.1} parent=1 // pred_fallthru
      _
    // Predicated region
    $region18: #{patemb_forward.1} parent=1 // pred_check
      _
    $region19: #{patemb_forward.1} parent=1 // pred_check_branch
      %54 = sbr.rel (0) target = $region21
    $region20: #{patemb_forward.1} parent=1 // pred_region
      _
    $region21: #{patemb_forward.1} parent=1 // pred_fallthru
      _
    // Predicated region
    $region22: #{patemb_forward.1} parent=1 // pred_check
      _
    $region23: #{patemb_forward.1} parent=1 // pred_check_branch
      %56 = sbr.rel (0) target = $region25
    $region24: #{patemb_forward.1} parent=1 // pred_region
      %s58 = ssub.s32 10240, 10240
      %59 = vsyncadd [#allocation8], %s58
      %s60 = sshll.u32 [#allocation7], 4
      %s61 = int_to_ptr.vmem [resolvable:$true] %s60
      %66 = dma.hbm_to_vmem [thread:$0]  %s5, 10240, %s61, [#allocation8], 128, 128, 8
    $region25: #{patemb_forward.1} parent=1 // pred_fallthru
      _
    // Predicated region
    $region26: #{patemb_forward.1} parent=1 // pred_check
      _
    $region27: #{patemb_forward.1} parent=1 // pred_check_branch
      %68 = sbr.rel (0) target = $region29
    $region28: #{patemb_forward.1} parent=1 // pred_region
      _
    $region29: #{patemb_forward.1} parent=1 // pred_fallthru
      _
    // Predicated region
    $region30: #{patemb_forward.1} parent=1 // pred_check
      _
    $region31: #{patemb_forward.1} parent=1 // pred_check_branch
      %70 = sbr.rel (0) target = $region33
    $region32: #{patemb_forward.1} parent=1 // pred_region
      %71 = dma.done [#allocation3], 512
    $region33: #{patemb_forward.1} parent=1 // pred_fallthru
      _
    // Predicated region
    $region34: #{patemb_forward.1} parent=1 // pred_check
      _
    $region35: #{patemb_forward.1} parent=1 // pred_check_branch
      %73 = sbr.rel (0) target = $region37
    $region36: #{patemb_forward.1} parent=1 // pred_region
      %74 = dma.done [#allocation5], 1280
    $region37: #{patemb_forward.1} parent=1 // pred_fallthru
      _
    // Predicated region
    $region38: #{patemb_forward.1} parent=1 // pred_check
      _
    $region39: #{patemb_forward.1} parent=1 // pred_check_branch
      %76 = sbr.rel (0) target = $region41
    $region40: #{patemb_forward.1} parent=1 // pred_region
      %77 = dma.done [#allocation5], 10240
    $region41: #{patemb_forward.1} parent=1 // pred_fallthru
      _
    // Predicated region
    $region42: #{patemb_forward.1} parent=1 // pred_check
      _
    $region43: #{patemb_forward.1} parent=1 // pred_check_branch
      %79 = sbr.rel (0) target = $region45
    $region44: #{patemb_forward.1} parent=1 // pred_region
      %80 = dma.done [#allocation8], 10240
    $region45: #{patemb_forward.1} parent=1 // pred_fallthru
      _
    %v81 = vld [vmem:[#allocation2] sm:$0xff]
    %v82 = vld [vmem:[#allocation2 + $0x8] sm:$0xff]
    %v83 = vld [vmem:[#allocation2 + $0x10] sm:$0xff]
    %v84 = vld [vmem:[#allocation2 + $0x18] sm:$0xff]
    %v87 = vrot.slane %v82, 6
    %v88 = vrot.slane %v84, 6
    %vm93 = vcmask 1041408
    %v94 = vrot.slane %v81, 6
    %v95 = vsel %vm93, %v94, %v87
    %v96 = vrot.slane %v83, 6
    %v97 = vsel %vm93, %v96, %v88
    %v100 = vsel %vm93, %v87, %v94
    %v101 = vsel %vm93, %v88, %v96
    %v102 = vld [vmem:[#allocation4] sm:$0xff]
    %v103 = vld [vmem:[#allocation4 + $0x8] sm:$0xff]
    %vm106 = vcmask 1046528
    %v107 = vrot.slane %v100, 1
    %v108 = vrot.slane %v95, 1
    %v109 = vsel %vm106, %v107, %v108
    %v110 = vsel %vm106, %v108, %v107
    %v111 = vrot.slane %v101, 1
    %v112 = vrot.slane %v97, 1
    %v113 = vsel %vm106, %v111, %v112
    %v114 = vsel %vm106, %v112, %v111
    %s115 = scalar_lea.vmem [#allocation4], 16
    %v116 = vld [vmem:[%s115] sm:$0xff]
    %v117 = vld [vmem:[%s115 + $0x8] sm:$0xff]
    %vm118 = vcmask 130048
    %v119 = vsel %vm118, %v109, 0
    %v121 = vsel %vm118, %v110, 0
    %v123 = vsel %vm118, %v113, 0
    %v125 = vsel %vm118, %v114, 0
    %127 = vmatprep.subr.mxu0 0.0
    %128 = vmatpush1.msra.mxu0 %v116
    %129 = vmatprep.subr.mxu0 0.0
    %130 = vmatpush1.msra.mxu0 %v117
    %131 = vmatprep.subr.mxu0 0.0
    %132 = vmatpush1.msra.mxu0 0.0
    %133 = vmatprep.subr.mxu0 0.0
    %134 = vmatpush1.msra.mxu0 0.0
    %135 = vmatprep.subr.mxu0 0.0
    %136 = vmatpush1.msra.mxu0 0.0
    %137 = vmatprep.subr.mxu0 0.0
    %138 = vmatpush1.msra.mxu0 0.0
    %139 = vmatprep.subr.mxu0 0.0
    %140 = vmatpush1.msra.mxu0 0.0
    %141 = vmatprep.subr.mxu0 0.0
    %142 = vmatpush1.msra.mxu0 0.0
    %143 = vmatprep.subr.mxu0 0.0
    %144 = vmatpush1.msra.mxu0 0.0
    %145 = vmatprep.subr.mxu0 0.0
    %146 = vmatpush1.msra.mxu0 0.0
    %147 = vmatprep.subr.mxu0 0.0
    %148 = vmatpush1.msra.mxu0 0.0
    %149 = vmatprep.subr.mxu0 0.0
    %150 = vmatpush1.msra.mxu0 0.0
    %151 = vmatprep.subr.mxu0 0.0
    %152 = vmatpush1.msra.mxu0 0.0
    %153 = vmatprep.subr.mxu0 0.0
    %154 = vmatpush1.msra.mxu0 0.0
    %155 = vmatprep.subr.mxu0 0.0
    %156 = vmatpush1.msra.mxu0 0.0
    %157 = vmatprep.subr.mxu0 0.0
    %158 = vmatpush1.msra.mxu0 0.0
    %159 = vmatprep.subr.mxu0 0.0
    %160 = vmatpush1.msra.mxu0 0.0
    %161 = vmatprep.subr.mxu0 0.0
    %162 = vmatpush1.msra.mxu0 0.0
    %163 = vmatprep.subr.mxu0 0.0
    %164 = vmatpush1.msra.mxu0 0.0
    %165 = vmatprep.subr.mxu0 0.0
    %166 = vmatpush1.msra.mxu0 0.0
    %167 = vmatprep.subr.mxu0 0.0
    %168 = vmatpush1.msra.mxu0 0.0
    %169 = vmatprep.subr.mxu0 0.0
    %170 = vmatpush1.msra.mxu0 0.0
    %171 = vmatprep.subr.mxu0 0.0
    %172 = vmatpush1.msra.mxu0 0.0
    %173 = vmatprep.subr.mxu0 0.0
    %174 = vmatpush1.msra.mxu0 0.0
    %175 = vmatprep.subr.mxu0 0.0
    %176 = vmatpush1.msra.mxu0 0.0
    %177 = vmatprep.subr.mxu0 0.0
    %178 = vmatpush1.msra.mxu0 0.0
    %179 = vmatprep.subr.mxu0 0.0
    %180 = vmatpush1.msra.mxu0 0.0
    %181 = vmatprep.subr.mxu0 0.0
    %182 = vmatpush1.msra.mxu0 0.0
    %183 = vmatprep.subr.mxu0 0.0
    %184 = vmatpush1.msra.mxu0 0.0
    %185 = vmatprep.subr.mxu0 0.0
    %186 = vmatpush1.msra.mxu0 0.0
    %187 = vmatprep.subr.mxu0 0.0
    %188 = vmatpush1.msra.mxu0 0.0
    %189 = vmatprep.subr.mxu0 0.0
    %190 = vmatpush1.msra.mxu0 0.0
    %191 = vmatprep.mubr.f32.mxu0 0.0
    %192 = vmatmul.mubr.f32.gmra.mrb[0].mxu0 %v119
    %v193 = vpop.f32.mrb[0].mxu0
    %v194 = vadd.f32 0.0, %v193
    %v195 = vpop.f32.mrb[0].mxu0
    %196 = vmatprep.mubr.f32.mxu0 0.0
    %197 = vmatmul.mubr.f32.gmra.mrb[0].mxu0 %v121
    %v198 = vpop.f32.mrb[0].mxu0
    %v199 = vadd.f32 0.0, %v198
    %v200 = vpop.f32.mrb[0].mxu0
    %201 = vmatprep.mubr.f32.mxu0 0.0
    %202 = vmatmul.mubr.f32.gmra.mrb[0].mxu0 %v123
    %v203 = vpop.f32.mrb[0].mxu0
    %v204 = vadd.f32 0.0, %v203
    %v205 = vpop.f32.mrb[0].mxu0
    %206 = vmatprep.mubr.f32.mxu0 0.0
    %207 = vmatmul.mubr.f32.gmra.mrb[0].mxu0 %v125
    %v208 = vpop.f32.mrb[0].mxu0
    %v209 = vadd.f32 0.0, %v208
    %v210 = vpop.f32.mrb[0].mxu0
    %211 = vdwg.mxu0
    %v212 = vsel %vm118, %v100, 0
    %v214 = vsel %vm118, %v95, 0
    %v216 = vsel %vm118, %v101, 0
    %v218 = vsel %vm118, %v97, 0
    %220 = vmatprep.subr.mxu0 0.0
    %221 = vmatpush1.msra.mxu0 %v102
    %222 = vmatprep.subr.mxu0 0.0
    %223 = vmatpush1.msra.mxu0 %v103
    %224 = vmatprep.subr.mxu0 0.0
    %225 = vmatpush1.msra.mxu0 0.0
    %226 = vmatprep.subr.mxu0 0.0
    %227 = vmatpush1.msra.mxu0 0.0
    %228 = vmatprep.subr.mxu0 0.0
    %229 = vmatpush1.msra.mxu0 0.0
    %230 = vmatprep.subr.mxu0 0.0
    %231 = vmatpush1.msra.mxu0 0.0
    %232 = vmatprep.subr.mxu0 0.0
    %233 = vmatpush1.msra.mxu0 0.0
    %234 = vmatprep.subr.mxu0 0.0
    %235 = vmatpush1.msra.mxu0 0.0
    %236 = vmatprep.subr.mxu0 0.0
    %237 = vmatpush1.msra.mxu0 0.0
    %238 = vmatprep.subr.mxu0 0.0
    %239 = vmatpush1.msra.mxu0 0.0
    %240 = vmatprep.subr.mxu0 0.0
    %241 = vmatpush1.msra.mxu0 0.0
    %242 = vmatprep.subr.mxu0 0.0
    %243 = vmatpush1.msra.mxu0 0.0
    %244 = vmatprep.subr.mxu0 0.0
    %245 = vmatpush1.msra.mxu0 0.0
    %246 = vmatprep.subr.mxu0 0.0
    %247 = vmatpush1.msra.mxu0 0.0
    %248 = vmatprep.subr.mxu0 0.0
    %249 = vmatpush1.msra.mxu0 0.0
    %250 = vmatprep.subr.mxu0 0.0
    %251 = vmatpush1.msra.mxu0 0.0
    %252 = vmatprep.subr.mxu0 0.0
    %253 = vmatpush1.msra.mxu0 0.0
    %254 = vmatprep.subr.mxu0 0.0
    %255 = vmatpush1.msra.mxu0 0.0
    %256 = vmatprep.subr.mxu0 0.0
    %257 = vmatpush1.msra.mxu0 0.0
    %258 = vmatprep.subr.mxu0 0.0
    %259 = vmatpush1.msra.mxu0 0.0
    %260 = vmatprep.subr.mxu0 0.0
    %261 = vmatpush1.msra.mxu0 0.0
    %262 = vmatprep.subr.mxu0 0.0
    %263 = vmatpush1.msra.mxu0 0.0
    %264 = vmatprep.subr.mxu0 0.0
    %265 = vmatpush1.msra.mxu0 0.0
    %266 = vmatprep.subr.mxu0 0.0
    %267 = vmatpush1.msra.mxu0 0.0
    %268 = vmatprep.subr.mxu0 0.0
    %269 = vmatpush1.msra.mxu0 0.0
    %270 = vmatprep.subr.mxu0 0.0
    %271 = vmatpush1.msra.mxu0 0.0
    %272 = vmatprep.subr.mxu0 0.0
    %273 = vmatpush1.msra.mxu0 0.0
    %274 = vmatprep.subr.mxu0 0.0
    %275 = vmatpush1.msra.mxu0 0.0
    %276 = vmatprep.subr.mxu0 0.0
    %277 = vmatpush1.msra.mxu0 0.0
    %278 = vmatprep.subr.mxu0 0.0
    %279 = vmatpush1.msra.mxu0 0.0
    %280 = vmatprep.subr.mxu0 0.0
    %281 = vmatpush1.msra.mxu0 0.0
    %282 = vmatprep.subr.mxu0 0.0
    %283 = vmatpush1.msra.mxu0 0.0
    %284 = vmatprep.mubr.f32.mxu0 0.0
    %285 = vmatmul.mubr.f32.gmra.mrb[0].mxu0 %v212
    %v286 = vpop.f32.mrb[0].mxu0
    %v287 = vadd.f32 %v194, %v286
    %v288 = vpop.f32.mrb[0].mxu0
    %289 = vmatprep.mubr.f32.mxu0 0.0
    %290 = vmatmul.mubr.f32.gmra.mrb[0].mxu0 %v214
    %v291 = vpop.f32.mrb[0].mxu0
    %v292 = vadd.f32 %v199, %v291
    %v293 = vpop.f32.mrb[0].mxu0
    %294 = vmatprep.mubr.f32.mxu0 0.0
    %295 = vmatmul.mubr.f32.gmra.mrb[0].mxu0 %v216
    %v296 = vpop.f32.mrb[0].mxu0
    %v297 = vadd.f32 %v204, %v296
    %v298 = vpop.f32.mrb[0].mxu0
    %299 = vmatprep.mubr.f32.mxu0 0.0
    %300 = vmatmul.mubr.f32.gmra.mrb[0].mxu0 %v218
    %v301 = vpop.f32.mrb[0].mxu0
    %v302 = vadd.f32 %v209, %v301
    %v303 = vpop.f32.mrb[0].mxu0
    %304 = vdwg.mxu0
    %vm305 = vcmask 1045504
    %v306 = vrot.slane %v100, 2
    %v307 = vrot.slane %v95, 2
    %v308 = vsel %vm305, %v306, %v307
    %v309 = vsel %vm305, %v307, %v306
    %v310 = vrot.slane %v101, 2
    %v311 = vrot.slane %v97, 2
    %v312 = vsel %vm305, %v310, %v311
    %v313 = vsel %vm305, %v311, %v310
    %s314 = scalar_lea.vmem [#allocation4], 32
    %v315 = vld [vmem:[%s314] sm:$0xff]
    %v316 = vld [vmem:[%s314 + $0x8] sm:$0xff]
    %v317 = vsel %vm118, %v308, 0
    %v319 = vsel %vm118, %v309, 0
    %v321 = vsel %vm118, %v312, 0
    %v323 = vsel %vm118, %v313, 0
    %325 = vmatprep.subr.mxu0 0.0
    %326 = vmatpush1.msra.mxu0 %v315
    %327 = vmatprep.subr.mxu0 0.0
    %328 = vmatpush1.msra.mxu0 %v316
    %329 = vmatprep.subr.mxu0 0.0
    %330 = vmatpush1.msra.mxu0 0.0
    %331 = vmatprep.subr.mxu0 0.0
    %332 = vmatpush1.msra.mxu0 0.0
    %333 = vmatprep.subr.mxu0 0.0
    %334 = vmatpush1.msra.mxu0 0.0
    %335 = vmatprep.subr.mxu0 0.0
    %336 = vmatpush1.msra.mxu0 0.0
    %337 = vmatprep.subr.mxu0 0.0
    %338 = vmatpush1.msra.mxu0 0.0
    %339 = vmatprep.subr.mxu0 0.0
    %340 = vmatpush1.msra.mxu0 0.0
    %341 = vmatprep.subr.mxu0 0.0
    %342 = vmatpush1.msra.mxu0 0.0
    %343 = vmatprep.subr.mxu0 0.0
    %344 = vmatpush1.msra.mxu0 0.0
    %345 = vmatprep.subr.mxu0 0.0
    %346 = vmatpush1.msra.mxu0 0.0
    %347 = vmatprep.subr.mxu0 0.0
    %348 = vmatpush1.msra.mxu0 0.0
    %349 = vmatprep.subr.mxu0 0.0
    %350 = vmatpush1.msra.mxu0 0.0
    %351 = vmatprep.subr.mxu0 0.0
    %352 = vmatpush1.msra.mxu0 0.0
    %353 = vmatprep.subr.mxu0 0.0
    %354 = vmatpush1.msra.mxu0 0.0
    %355 = vmatprep.subr.mxu0 0.0
    %356 = vmatpush1.msra.mxu0 0.0
    %357 = vmatprep.subr.mxu0 0.0
    %358 = vmatpush1.msra.mxu0 0.0
    %359 = vmatprep.subr.mxu0 0.0
    %360 = vmatpush1.msra.mxu0 0.0
    %361 = vmatprep.subr.mxu0 0.0
    %362 = vmatpush1.msra.mxu0 0.0
    %363 = vmatprep.subr.mxu0 0.0
    %364 = vmatpush1.msra.mxu0 0.0
    %365 = vmatprep.subr.mxu0 0.0
    %366 = vmatpush1.msra.mxu0 0.0
    %367 = vmatprep.subr.mxu0 0.0
    %368 = vmatpush1.msra.mxu0 0.0
    %369 = vmatprep.subr.mxu0 0.0
    %370 = vmatpush1.msra.mxu0 0.0
    %371 = vmatprep.subr.mxu0 0.0
    %372 = vmatpush1.msra.mxu0 0.0
    %373 = vmatprep.subr.mxu0 0.0
    %374 = vmatpush1.msra.mxu0 0.0
    %375 = vmatprep.subr.mxu0 0.0
    %376 = vmatpush1.msra.mxu0 0.0
    %377 = vmatprep.subr.mxu0 0.0
    %378 = vmatpush1.msra.mxu0 0.0
    %379 = vmatprep.subr.mxu0 0.0
    %380 = vmatpush1.msra.mxu0 0.0
    %381 = vmatprep.subr.mxu0 0.0
    %382 = vmatpush1.msra.mxu0 0.0
    %383 = vmatprep.subr.mxu0 0.0
    %384 = vmatpush1.msra.mxu0 0.0
    %385 = vmatprep.subr.mxu0 0.0
    %386 = vmatpush1.msra.mxu0 0.0
    %387 = vmatprep.subr.mxu0 0.0
    %388 = vmatpush1.msra.mxu0 0.0
    %389 = vmatprep.mubr.f32.mxu0 0.0
    %390 = vmatmul.mubr.f32.gmra.mrb[0].mxu0 %v317
    %v391 = vpop.f32.mrb[0].mxu0
    %v392 = vadd.f32 0.0, %v391
    %v393 = vpop.f32.mrb[0].mxu0
    %394 = vmatprep.mubr.f32.mxu0 0.0
    %395 = vmatmul.mubr.f32.gmra.mrb[0].mxu0 %v319
    %v396 = vpop.f32.mrb[0].mxu0
    %v397 = vadd.f32 0.0, %v396
    %v398 = vpop.f32.mrb[0].mxu0
    %399 = vmatprep.mubr.f32.mxu0 0.0
    %400 = vmatmul.mubr.f32.gmra.mrb[0].mxu0 %v321
    %v401 = vpop.f32.mrb[0].mxu0
    %v402 = vadd.f32 0.0, %v401
    %v403 = vpop.f32.mrb[0].mxu0
    %404 = vmatprep.mubr.f32.mxu0 0.0
    %405 = vmatmul.mubr.f32.gmra.mrb[0].mxu0 %v323
    %v406 = vpop.f32.mrb[0].mxu0
    %v407 = vadd.f32 0.0, %v406
    %v408 = vpop.f32.mrb[0].mxu0
    %409 = vdwg.mxu0
    %v410 = vadd.f32 %v287, %v392
    %v411 = vadd.f32 %v292, %v397
    %v412 = vadd.f32 %v297, %v402
    %v413 = vadd.f32 %v302, %v407
    %vm414 = vcmask 1044480
    %v415 = vrot.slane %v100, 3
    %v416 = vrot.slane %v95, 3
    %v417 = vsel %vm414, %v415, %v416
    %v418 = vsel %vm414, %v416, %v415
    %v419 = vrot.slane %v101, 3
    %v420 = vrot.slane %v97, 3
    %v421 = vsel %vm414, %v419, %v420
    %v422 = vsel %vm414, %v420, %v419
    %s423 = scalar_lea.vmem [#allocation4], 48
    %v424 = vld [vmem:[%s423] sm:$0xff]
    %v425 = vld [vmem:[%s423 + $0x8] sm:$0xff]
    %v426 = vsel %vm118, %v417, 0
    %v428 = vsel %vm118, %v418, 0
    %v430 = vsel %vm118, %v421, 0
    %v432 = vsel %vm118, %v422, 0
    %434 = vmatprep.subr.mxu0 0.0
    %435 = vmatpush1.msra.mxu0 %v424
    %436 = vmatprep.subr.mxu0 0.0
    %437 = vmatpush1.msra.mxu0 %v425
    %438 = vmatprep.subr.mxu0 0.0
    %439 = vmatpush1.msra.mxu0 0.0
    %440 = vmatprep.subr.mxu0 0.0
    %441 = vmatpush1.msra.mxu0 0.0
    %442 = vmatprep.subr.mxu0 0.0
    %443 = vmatpush1.msra.mxu0 0.0
    %444 = vmatprep.subr.mxu0 0.0
    %445 = vmatpush1.msra.mxu0 0.0
    %446 = vmatprep.subr.mxu0 0.0
    %447 = vmatpush1.msra.mxu0 0.0
    %448 = vmatprep.subr.mxu0 0.0
    %449 = vmatpush1.msra.mxu0 0.0
    %450 = vmatprep.subr.mxu0 0.0
    %451 = vmatpush1.msra.mxu0 0.0
    %452 = vmatprep.subr.mxu0 0.0
    %453 = vmatpush1.msra.mxu0 0.0
    %454 = vmatprep.subr.mxu0 0.0
    %455 = vmatpush1.msra.mxu0 0.0
    %456 = vmatprep.subr.mxu0 0.0
    %457 = vmatpush1.msra.mxu0 0.0
    %458 = vmatprep.subr.mxu0 0.0
    %459 = vmatpush1.msra.mxu0 0.0
    %460 = vmatprep.subr.mxu0 0.0
    %461 = vmatpush1.msra.mxu0 0.0
    %462 = vmatprep.subr.mxu0 0.0
    %463 = vmatpush1.msra.mxu0 0.0
    %464 = vmatprep.subr.mxu0 0.0
    %465 = vmatpush1.msra.mxu0 0.0
    %466 = vmatprep.subr.mxu0 0.0
    %467 = vmatpush1.msra.mxu0 0.0
    %468 = vmatprep.subr.mxu0 0.0
    %469 = vmatpush1.msra.mxu0 0.0
    %470 = vmatprep.subr.mxu0 0.0
    %471 = vmatpush1.msra.mxu0 0.0
    %472 = vmatprep.subr.mxu0 0.0
    %473 = vmatpush1.msra.mxu0 0.0
    %474 = vmatprep.subr.mxu0 0.0
    %475 = vmatpush1.msra.mxu0 0.0
    %476 = vmatprep.subr.mxu0 0.0
    %477 = vmatpush1.msra.mxu0 0.0
    %478 = vmatprep.subr.mxu0 0.0
    %479 = vmatpush1.msra.mxu0 0.0
    %480 = vmatprep.subr.mxu0 0.0
    %481 = vmatpush1.msra.mxu0 0.0
    %482 = vmatprep.subr.mxu0 0.0
    %483 = vmatpush1.msra.mxu0 0.0
    %484 = vmatprep.subr.mxu0 0.0
    %485 = vmatpush1.msra.mxu0 0.0
    %486 = vmatprep.subr.mxu0 0.0
    %487 = vmatpush1.msra.mxu0 0.0
    %488 = vmatprep.subr.mxu0 0.0
    %489 = vmatpush1.msra.mxu0 0.0
    %490 = vmatprep.subr.mxu0 0.0
    %491 = vmatpush1.msra.mxu0 0.0
    %492 = vmatprep.subr.mxu0 0.0
    %493 = vmatpush1.msra.mxu0 0.0
    %494 = vmatprep.subr.mxu0 0.0
    %495 = vmatpush1.msra.mxu0 0.0
    %496 = vmatprep.subr.mxu0 0.0
    %497 = vmatpush1.msra.mxu0 0.0
    %498 = vmatprep.mubr.f32.mxu0 0.0
    %499 = vmatmul.mubr.f32.gmra.mrb[0].mxu0 %v426
    %v500 = vpop.f32.mrb[0].mxu0
    %v501 = vadd.f32 0.0, %v500
    %v502 = vpop.f32.mrb[0].mxu0
    %503 = vmatprep.mubr.f32.mxu0 0.0
    %504 = vmatmul.mubr.f32.gmra.mrb[0].mxu0 %v428
    %v505 = vpop.f32.mrb[0].mxu0
    %v506 = vadd.f32 0.0, %v505
    %v507 = vpop.f32.mrb[0].mxu0
    %508 = vmatprep.mubr.f32.mxu0 0.0
    %509 = vmatmul.mubr.f32.gmra.mrb[0].mxu0 %v430
    %v510 = vpop.f32.mrb[0].mxu0
    %v511 = vadd.f32 0.0, %v510
    %v512 = vpop.f32.mrb[0].mxu0
    %513 = vmatprep.mubr.f32.mxu0 0.0
    %514 = vmatmul.mubr.f32.gmra.mrb[0].mxu0 %v432
    %v515 = vpop.f32.mrb[0].mxu0
    %v516 = vadd.f32 0.0, %v515
    %v517 = vpop.f32.mrb[0].mxu0
    %518 = vdwg.mxu0
    %v519 = vadd.f32 %v410, %v501
    %v520 = vadd.f32 %v411, %v506
    %v521 = vadd.f32 %v412, %v511
    %v522 = vadd.f32 %v413, %v516
    %vm523 = vcmask 1043456
    %v524 = vrot.slane %v100, 4
    %v525 = vrot.slane %v95, 4
    %v526 = vsel %vm523, %v524, %v525
    %v527 = vsel %vm523, %v525, %v524
    %v528 = vrot.slane %v101, 4
    %v529 = vrot.slane %v97, 4
    %v530 = vsel %vm523, %v528, %v529
    %v531 = vsel %vm523, %v529, %v528
    %s532 = scalar_lea.vmem [#allocation4], 64
    %v533 = vld [vmem:[%s532] sm:$0xff]
    %v534 = vld [vmem:[%s532 + $0x8] sm:$0xff]
    %v535 = vsel %vm118, %v526, 0
    %v537 = vsel %vm118, %v527, 0
    %v539 = vsel %vm118, %v530, 0
    %v541 = vsel %vm118, %v531, 0
    %543 = vmatprep.subr.mxu0 0.0
    %544 = vmatpush1.msra.mxu0 %v533
    %545 = vmatprep.subr.mxu0 0.0
    %546 = vmatpush1.msra.mxu0 %v534
    %547 = vmatprep.subr.mxu0 0.0
    %548 = vmatpush1.msra.mxu0 0.0
    %549 = vmatprep.subr.mxu0 0.0
    %550 = vmatpush1.msra.mxu0 0.0
    %551 = vmatprep.subr.mxu0 0.0
    %552 = vmatpush1.msra.mxu0 0.0
    %553 = vmatprep.subr.mxu0 0.0
    %554 = vmatpush1.msra.mxu0 0.0
    %555 = vmatprep.subr.mxu0 0.0
    %556 = vmatpush1.msra.mxu0 0.0
    %557 = vmatprep.subr.mxu0 0.0
    %558 = vmatpush1.msra.mxu0 0.0
    %559 = vmatprep.subr.mxu0 0.0
    %560 = vmatpush1.msra.mxu0 0.0
    %561 = vmatprep.subr.mxu0 0.0
    %562 = vmatpush1.msra.mxu0 0.0
    %563 = vmatprep.subr.mxu0 0.0
    %564 = vmatpush1.msra.mxu0 0.0
    %565 = vmatprep.subr.mxu0 0.0
    %566 = vmatpush1.msra.mxu0 0.0
    %567 = vmatprep.subr.mxu0 0.0
    %568 = vmatpush1.msra.mxu0 0.0
    %569 = vmatprep.subr.mxu0 0.0
    %570 = vmatpush1.msra.mxu0 0.0
    %571 = vmatprep.subr.mxu0 0.0
    %572 = vmatpush1.msra.mxu0 0.0
    %573 = vmatprep.subr.mxu0 0.0
    %574 = vmatpush1.msra.mxu0 0.0
    %575 = vmatprep.subr.mxu0 0.0
    %576 = vmatpush1.msra.mxu0 0.0
    %577 = vmatprep.subr.mxu0 0.0
    %578 = vmatpush1.msra.mxu0 0.0
    %579 = vmatprep.subr.mxu0 0.0
    %580 = vmatpush1.msra.mxu0 0.0
    %581 = vmatprep.subr.mxu0 0.0
    %582 = vmatpush1.msra.mxu0 0.0
    %583 = vmatprep.subr.mxu0 0.0
    %584 = vmatpush1.msra.mxu0 0.0
    %585 = vmatprep.subr.mxu0 0.0
    %586 = vmatpush1.msra.mxu0 0.0
    %587 = vmatprep.subr.mxu0 0.0
    %588 = vmatpush1.msra.mxu0 0.0
    %589 = vmatprep.subr.mxu0 0.0
    %590 = vmatpush1.msra.mxu0 0.0
    %591 = vmatprep.subr.mxu0 0.0
    %592 = vmatpush1.msra.mxu0 0.0
    %593 = vmatprep.subr.mxu0 0.0
    %594 = vmatpush1.msra.mxu0 0.0
    %595 = vmatprep.subr.mxu0 0.0
    %596 = vmatpush1.msra.mxu0 0.0
    %597 = vmatprep.subr.mxu0 0.0
    %598 = vmatpush1.msra.mxu0 0.0
    %599 = vmatprep.subr.mxu0 0.0
    %600 = vmatpush1.msra.mxu0 0.0
    %601 = vmatprep.subr.mxu0 0.0
    %602 = vmatpush1.msra.mxu0 0.0
    %603 = vmatprep.subr.mxu0 0.0
    %604 = vmatpush1.msra.mxu0 0.0
    %605 = vmatprep.subr.mxu0 0.0
    %606 = vmatpush1.msra.mxu0 0.0
    %607 = vmatprep.mubr.f32.mxu0 0.0
    %608 = vmatmul.mubr.f32.gmra.mrb[0].mxu0 %v535
    %v609 = vpop.f32.mrb[0].mxu0
    %v610 = vadd.f32 0.0, %v609
    %v611 = vpop.f32.mrb[0].mxu0
    %612 = vmatprep.mubr.f32.mxu0 0.0
    %613 = vmatmul.mubr.f32.gmra.mrb[0].mxu0 %v537
    %v614 = vpop.f32.mrb[0].mxu0
    %v615 = vadd.f32 0.0, %v614
    %v616 = vpop.f32.mrb[0].mxu0
    %617 = vmatprep.mubr.f32.mxu0 0.0
    %618 = vmatmul.mubr.f32.gmra.mrb[0].mxu0 %v539
    %v619 = vpop.f32.mrb[0].mxu0
    %v620 = vadd.f32 0.0, %v619
    %v621 = vpop.f32.mrb[0].mxu0
    %622 = vmatprep.mubr.f32.mxu0 0.0
    %623 = vmatmul.mubr.f32.gmra.mrb[0].mxu0 %v541
    %v624 = vpop.f32.mrb[0].mxu0
    %v625 = vadd.f32 0.0, %v624
    %v626 = vpop.f32.mrb[0].mxu0
    %627 = vdwg.mxu0
    %v628 = vadd.f32 %v519, %v610
    %v629 = vadd.f32 %v520, %v615
    %v630 = vadd.f32 %v521, %v620
    %v631 = vadd.f32 %v522, %v625
    %v632 = vld [vmem:[%s2] sm:$0x1]
    %v634 = vlaneseq
    %v635 = vshrl.u32 %v634, 7
    %v636 = vsub.s32 0, %v635
    %v637 = vrot.slane %v632, %v636
    %v639 = vadd.f32 %v628, %v637
    %v640 = vadd.f32 %v629, %v637
    %v641 = vadd.f32 %v630, %v637
    %v642 = vadd.f32 %v631, %v637
    %vm643 = vcmp.ge.f32.partialorder %v639, 0.0
    %vm644 = vcmp.ge.f32.partialorder %v640, 0.0
    %vm645 = vcmp.ge.f32.partialorder %v641, 0.0
    %vm646 = vcmp.ge.f32.partialorder %v642, 0.0
    %v647 = vmul.f32 %v639, 0.01
    %v648 = vmul.f32 %v640, 0.01
    %v649 = vmul.f32 %v641, 0.01
    %v650 = vmul.f32 %v642, 0.01
    %v651 = vsel %vm643, %v639, %v647
    %v652 = vsel %vm644, %v640, %v648
    %v653 = vsel %vm645, %v641, %v649
    %v654 = vsel %vm646, %v642, %v650
    %v657 = vrot.slane %v652, 6
    %v658 = vrot.slane %v654, 6
    %v663 = vrot.slane %v651, 6
    %v664 = vsel %vm93, %v663, %v657
    %v665 = vrot.slane %v653, 6
    %v666 = vsel %vm93, %v665, %v658
    %v671 = vsel %vm93, %v657, %v663
    %v672 = vsel %vm93, %v658, %v665
    %v673 = vld [vmem:[#allocation6] sm:$0xff]
    %v674 = vld [vmem:[#allocation6 + $0x8] sm:$0xff]
    %v675 = vld [vmem:[#allocation6 + $0x10] sm:$0xff]
    %v676 = vld [vmem:[#allocation6 + $0x18] sm:$0xff]
    %v677 = vld [vmem:[#allocation6 + $0x20] sm:$0xff]
    %v678 = vld [vmem:[#allocation6 + $0x28] sm:$0xff]
    %v679 = vld [vmem:[#allocation6 + $0x30] sm:$0xff]
    %v680 = vld [vmem:[#allocation6 + $0x38] sm:$0xff]
    %v681 = vld [vmem:[#allocation6 + $0x40] sm:$0xff]
    %v682 = vld [vmem:[#allocation6 + $0x48] sm:$0xff]
    %v683 = vld [vmem:[#allocation6 + $0x50] sm:$0xff]
    %v684 = vld [vmem:[#allocation6 + $0x58] sm:$0xff]
    %v685 = vld [vmem:[#allocation6 + $0x60] sm:$0xff]
    %v686 = vld [vmem:[#allocation6 + $0x68] sm:$0xff]
    %v687 = vld [vmem:[#allocation6 + $0x70] sm:$0xff]
    %v688 = vld [vmem:[#allocation6 + $0x78] sm:$0xff]
    %v691 = vrot.slane %v671, 1
    %v692 = vrot.slane %v664, 1
    %v693 = vsel %vm106, %v691, %v692
    %v694 = vsel %vm106, %v692, %v691
    %v695 = vrot.slane %v672, 1
    %v696 = vrot.slane %v666, 1
    %v697 = vsel %vm106, %v695, %v696
    %v698 = vsel %vm106, %v696, %v695
    %s703 = scalar_lea.vmem [#allocation6], 128
    %v704 = vld [vmem:[%s703] sm:$0xff]
    %v705 = vld [vmem:[%s703 + $0x8] sm:$0xff]
    %v706 = vld [vmem:[%s703 + $0x10] sm:$0xff]
    %v707 = vld [vmem:[%s703 + $0x18] sm:$0xff]
    %v708 = vld [vmem:[%s703 + $0x20] sm:$0xff]
    %v709 = vld [vmem:[%s703 + $0x28] sm:$0xff]
    %v710 = vld [vmem:[%s703 + $0x30] sm:$0xff]
    %v711 = vld [vmem:[%s703 + $0x38] sm:$0xff]
    %v712 = vld [vmem:[%s703 + $0x40] sm:$0xff]
    %v713 = vld [vmem:[%s703 + $0x48] sm:$0xff]
    %v714 = vld [vmem:[%s703 + $0x50] sm:$0xff]
    %v715 = vld [vmem:[%s703 + $0x58] sm:$0xff]
    %v716 = vld [vmem:[%s703 + $0x60] sm:$0xff]
    %v717 = vld [vmem:[%s703 + $0x68] sm:$0xff]
    %v718 = vld [vmem:[%s703 + $0x70] sm:$0xff]
    %v719 = vld [vmem:[%s703 + $0x78] sm:$0xff]
    %720 = vmatprep.subr.mxu0 0.0
    %721 = vmatpush1.msra.mxu0 %v704
    %722 = vmatprep.subr.mxu0 0.0
    %723 = vmatpush1.msra.mxu0 %v705
    %724 = vmatprep.subr.mxu0 0.0
    %725 = vmatpush1.msra.mxu0 %v706
    %726 = vmatprep.subr.mxu0 0.0
    %727 = vmatpush1.msra.mxu0 %v707
    %728 = vmatprep.subr.mxu0 0.0
    %729 = vmatpush1.msra.mxu0 %v708
    %730 = vmatprep.subr.mxu0 0.0
    %731 = vmatpush1.msra.mxu0 %v709
    %732 = vmatprep.subr.mxu0 0.0
    %733 = vmatpush1.msra.mxu0 %v710
    %734 = vmatprep.subr.mxu0 0.0
    %735 = vmatpush1.msra.mxu0 %v711
    %736 = vmatprep.subr.mxu0 0.0
    %737 = vmatpush1.msra.mxu0 %v712
    %738 = vmatprep.subr.mxu0 0.0
    %739 = vmatpush1.msra.mxu0 %v713
    %740 = vmatprep.subr.mxu0 0.0
    %741 = vmatpush1.msra.mxu0 %v714
    %742 = vmatprep.subr.mxu0 0.0
    %743 = vmatpush1.msra.mxu0 %v715
    %744 = vmatprep.subr.mxu0 0.0
    %745 = vmatpush1.msra.mxu0 %v716
    %746 = vmatprep.subr.mxu0 0.0
    %747 = vmatpush1.msra.mxu0 %v717
    %748 = vmatprep.subr.mxu0 0.0
    %749 = vmatpush1.msra.mxu0 %v718
    %750 = vmatprep.subr.mxu0 0.0
    %751 = vmatpush1.msra.mxu0 %v719
    %752 = vmatprep.subr.mxu0 0.0
    %753 = vmatpush1.msra.mxu0 0.0
    %754 = vmatprep.subr.mxu0 0.0
    %755 = vmatpush1.msra.mxu0 0.0
    %756 = vmatprep.subr.mxu0 0.0
    %757 = vmatpush1.msra.mxu0 0.0
    %758 = vmatprep.subr.mxu0 0.0
    %759 = vmatpush1.msra.mxu0 0.0
    %760 = vmatprep.subr.mxu0 0.0
    %761 = vmatpush1.msra.mxu0 0.0
    %762 = vmatprep.subr.mxu0 0.0
    %763 = vmatpush1.msra.mxu0 0.0
    %764 = vmatprep.subr.mxu0 0.0
    %765 = vmatpush1.msra.mxu0 0.0
    %766 = vmatprep.subr.mxu0 0.0
    %767 = vmatpush1.msra.mxu0 0.0
    %768 = vmatprep.subr.mxu0 0.0
    %769 = vmatpush1.msra.mxu0 0.0
    %770 = vmatprep.subr.mxu0 0.0
    %771 = vmatpush1.msra.mxu0 0.0
    %772 = vmatprep.subr.mxu0 0.0
    %773 = vmatpush1.msra.mxu0 0.0
    %774 = vmatprep.subr.mxu0 0.0
    %775 = vmatpush1.msra.mxu0 0.0
    %776 = vmatprep.subr.mxu0 0.0
    %777 = vmatpush1.msra.mxu0 0.0
    %778 = vmatprep.subr.mxu0 0.0
    %779 = vmatpush1.msra.mxu0 0.0
    %780 = vmatprep.subr.mxu0 0.0
    %781 = vmatpush1.msra.mxu0 0.0
    %782 = vmatprep.subr.mxu0 0.0
    %783 = vmatpush1.msra.mxu0 0.0
    %784 = vmatprep.mubr.f32.mxu0 0.0
    %785 = vmatmul.mubr.f32.gmra.mrb[0].mxu0 %v693
    %v786 = vpop.f32.mrb[0].mxu0
    %v787 = vadd.f32 0.0, %v786
    %v788 = vpop.f32.mrb[0].mxu0
    %789 = vmatprep.mubr.f32.mxu0 0.0
    %790 = vmatmul.mubr.f32.gmra.mrb[0].mxu0 %v694
    %v791 = vpop.f32.mrb[0].mxu0
    %v792 = vadd.f32 0.0, %v791
    %v793 = vpop.f32.mrb[0].mxu0
    %794 = vmatprep.mubr.f32.mxu0 0.0
    %795 = vmatmul.mubr.f32.gmra.mrb[0].mxu0 %v697
    %v796 = vpop.f32.mrb[0].mxu0
    %v797 = vadd.f32 0.0, %v796
    %v798 = vpop.f32.mrb[0].mxu0
    %799 = vmatprep.mubr.f32.mxu0 0.0
    %800 = vmatmul.mubr.f32.gmra.mrb[0].mxu0 %v698
    %v801 = vpop.f32.mrb[0].mxu0
    %v802 = vadd.f32 0.0, %v801
    %v803 = vpop.f32.mrb[0].mxu0
    %804 = vdwg.mxu0
    %805 = vmatprep.subr.mxu0 0.0
    %806 = vmatpush1.msra.mxu0 %v673
    %807 = vmatprep.subr.mxu0 0.0
    %808 = vmatpush1.msra.mxu0 %v674
    %809 = vmatprep.subr.mxu0 0.0
    %810 = vmatpush1.msra.mxu0 %v675
    %811 = vmatprep.subr.mxu0 0.0
    %812 = vmatpush1.msra.mxu0 %v676
    %813 = vmatprep.subr.mxu0 0.0
    %814 = vmatpush1.msra.mxu0 %v677
    %815 = vmatprep.subr.mxu0 0.0
    %816 = vmatpush1.msra.mxu0 %v678
    %817 = vmatprep.subr.mxu0 0.0
    %818 = vmatpush1.msra.mxu0 %v679
    %819 = vmatprep.subr.mxu0 0.0
    %820 = vmatpush1.msra.mxu0 %v680
    %821 = vmatprep.subr.mxu0 0.0
    %822 = vmatpush1.msra.mxu0 %v681
    %823 = vmatprep.subr.mxu0 0.0
    %824 = vmatpush1.msra.mxu0 %v682
    %825 = vmatprep.subr.mxu0 0.0
    %826 = vmatpush1.msra.mxu0 %v683
    %827 = vmatprep.subr.mxu0 0.0
    %828 = vmatpush1.msra.mxu0 %v684
    %829 = vmatprep.subr.mxu0 0.0
    %830 = vmatpush1.msra.mxu0 %v685
    %831 = vmatprep.subr.mxu0 0.0
    %832 = vmatpush1.msra.mxu0 %v686
    %833 = vmatprep.subr.mxu0 0.0
    %834 = vmatpush1.msra.mxu0 %v687
    %835 = vmatprep.subr.mxu0 0.0
    %836 = vmatpush1.msra.mxu0 %v688
    %837 = vmatprep.subr.mxu0 0.0
    %838 = vmatpush1.msra.mxu0 0.0
    %839 = vmatprep.subr.mxu0 0.0
    %840 = vmatpush1.msra.mxu0 0.0
    %841 = vmatprep.subr.mxu0 0.0
    %842 = vmatpush1.msra.mxu0 0.0
    %843 = vmatprep.subr.mxu0 0.0
    %844 = vmatpush1.msra.mxu0 0.0
    %845 = vmatprep.subr.mxu0 0.0
    %846 = vmatpush1.msra.mxu0 0.0
    %847 = vmatprep.subr.mxu0 0.0
    %848 = vmatpush1.msra.mxu0 0.0
    %849 = vmatprep.subr.mxu0 0.0
    %850 = vmatpush1.msra.mxu0 0.0
    %851 = vmatprep.subr.mxu0 0.0
    %852 = vmatpush1.msra.mxu0 0.0
    %853 = vmatprep.subr.mxu0 0.0
    %854 = vmatpush1.msra.mxu0 0.0
    %855 = vmatprep.subr.mxu0 0.0
    %856 = vmatpush1.msra.mxu0 0.0
    %857 = vmatprep.subr.mxu0 0.0
    %858 = vmatpush1.msra.mxu0 0.0
    %859 = vmatprep.subr.mxu0 0.0
    %860 = vmatpush1.msra.mxu0 0.0
    %861 = vmatprep.subr.mxu0 0.0
    %862 = vmatpush1.msra.mxu0 0.0
    %863 = vmatprep.subr.mxu0 0.0
    %864 = vmatpush1.msra.mxu0 0.0
    %865 = vmatprep.subr.mxu0 0.0
    %866 = vmatpush1.msra.mxu0 0.0
    %867 = vmatprep.subr.mxu0 0.0
    %868 = vmatpush1.msra.mxu0 0.0
    %869 = vmatprep.mubr.f32.mxu0 0.0
    %870 = vmatmul.mubr.f32.gmra.mrb[0].mxu0 %v671
    %v871 = vpop.f32.mrb[0].mxu0
    %v872 = vadd.f32 %v787, %v871
    %v873 = vpop.f32.mrb[0].mxu0
    %874 = vmatprep.mubr.f32.mxu0 0.0
    %875 = vmatmul.mubr.f32.gmra.mrb[0].mxu0 %v664
    %v876 = vpop.f32.mrb[0].mxu0
    %v877 = vadd.f32 %v792, %v876
    %v878 = vpop.f32.mrb[0].mxu0
    %879 = vmatprep.mubr.f32.mxu0 0.0
    %880 = vmatmul.mubr.f32.gmra.mrb[0].mxu0 %v672
    %v881 = vpop.f32.mrb[0].mxu0
    %v882 = vadd.f32 %v797, %v881
    %v883 = vpop.f32.mrb[0].mxu0
    %884 = vmatprep.mubr.f32.mxu0 0.0
    %885 = vmatmul.mubr.f32.gmra.mrb[0].mxu0 %v666
    %v886 = vpop.f32.mrb[0].mxu0
    %v887 = vadd.f32 %v802, %v886
    %v888 = vpop.f32.mrb[0].mxu0
    %889 = vdwg.mxu0
    %v890 = vrot.slane %v671, 2
    %v891 = vrot.slane %v664, 2
    %v892 = vsel %vm305, %v890, %v891
    %v893 = vsel %vm305, %v891, %v890
    %v894 = vrot.slane %v672, 2
    %v895 = vrot.slane %v666, 2
    %v896 = vsel %vm305, %v894, %v895
    %v897 = vsel %vm305, %v895, %v894
    %s902 = scalar_lea.vmem [#allocation6], 256
    %v903 = vld [vmem:[%s902] sm:$0xff]
    %v904 = vld [vmem:[%s902 + $0x8] sm:$0xff]
    %v905 = vld [vmem:[%s902 + $0x10] sm:$0xff]
    %v906 = vld [vmem:[%s902 + $0x18] sm:$0xff]
    %v907 = vld [vmem:[%s902 + $0x20] sm:$0xff]
    %v908 = vld [vmem:[%s902 + $0x28] sm:$0xff]
    %v909 = vld [vmem:[%s902 + $0x30] sm:$0xff]
    %v910 = vld [vmem:[%s902 + $0x38] sm:$0xff]
    %v911 = vld [vmem:[%s902 + $0x40] sm:$0xff]
    %v912 = vld [vmem:[%s902 + $0x48] sm:$0xff]
    %v913 = vld [vmem:[%s902 + $0x50] sm:$0xff]
    %v914 = vld [vmem:[%s902 + $0x58] sm:$0xff]
    %v915 = vld [vmem:[%s902 + $0x60] sm:$0xff]
    %v916 = vld [vmem:[%s902 + $0x68] sm:$0xff]
    %v917 = vld [vmem:[%s902 + $0x70] sm:$0xff]
    %v918 = vld [vmem:[%s902 + $0x78] sm:$0xff]
    %919 = vmatprep.subr.mxu0 0.0
    %920 = vmatpush1.msra.mxu0 %v903
    %921 = vmatprep.subr.mxu0 0.0
    %922 = vmatpush1.msra.mxu0 %v904
    %923 = vmatprep.subr.mxu0 0.0
    %924 = vmatpush1.msra.mxu0 %v905
    %925 = vmatprep.subr.mxu0 0.0
    %926 = vmatpush1.msra.mxu0 %v906
    %927 = vmatprep.subr.mxu0 0.0
    %928 = vmatpush1.msra.mxu0 %v907
    %929 = vmatprep.subr.mxu0 0.0
    %930 = vmatpush1.msra.mxu0 %v908
    %931 = vmatprep.subr.mxu0 0.0
    %932 = vmatpush1.msra.mxu0 %v909
    %933 = vmatprep.subr.mxu0 0.0
    %934 = vmatpush1.msra.mxu0 %v910
    %935 = vmatprep.subr.mxu0 0.0
    %936 = vmatpush1.msra.mxu0 %v911
    %937 = vmatprep.subr.mxu0 0.0
    %938 = vmatpush1.msra.mxu0 %v912
    %939 = vmatprep.subr.mxu0 0.0
    %940 = vmatpush1.msra.mxu0 %v913
    %941 = vmatprep.subr.mxu0 0.0
    %942 = vmatpush1.msra.mxu0 %v914
    %943 = vmatprep.subr.mxu0 0.0
    %944 = vmatpush1.msra.mxu0 %v915
    %945 = vmatprep.subr.mxu0 0.0
    %946 = vmatpush1.msra.mxu0 %v916
    %947 = vmatprep.subr.mxu0 0.0
    %948 = vmatpush1.msra.mxu0 %v917
    %949 = vmatprep.subr.mxu0 0.0
    %950 = vmatpush1.msra.mxu0 %v918
    %951 = vmatprep.subr.mxu0 0.0
    %952 = vmatpush1.msra.mxu0 0.0
    %953 = vmatprep.subr.mxu0 0.0
    %954 = vmatpush1.msra.mxu0 0.0
    %955 = vmatprep.subr.mxu0 0.0
    %956 = vmatpush1.msra.mxu0 0.0
    %957 = vmatprep.subr.mxu0 0.0
    %958 = vmatpush1.msra.mxu0 0.0
    %959 = vmatprep.subr.mxu0 0.0
    %960 = vmatpush1.msra.mxu0 0.0
    %961 = vmatprep.subr.mxu0 0.0
    %962 = vmatpush1.msra.mxu0 0.0
    %963 = vmatprep.subr.mxu0 0.0
    %964 = vmatpush1.msra.mxu0 0.0
    %965 = vmatprep.subr.mxu0 0.0
    %966 = vmatpush1.msra.mxu0 0.0
    %967 = vmatprep.subr.mxu0 0.0
    %968 = vmatpush1.msra.mxu0 0.0
    %969 = vmatprep.subr.mxu0 0.0
    %970 = vmatpush1.msra.mxu0 0.0
    %971 = vmatprep.subr.mxu0 0.0
    %972 = vmatpush1.msra.mxu0 0.0
    %973 = vmatprep.subr.mxu0 0.0
    %974 = vmatpush1.msra.mxu0 0.0
    %975 = vmatprep.subr.mxu0 0.0
    %976 = vmatpush1.msra.mxu0 0.0
    %977 = vmatprep.subr.mxu0 0.0
    %978 = vmatpush1.msra.mxu0 0.0
    %979 = vmatprep.subr.mxu0 0.0
    %980 = vmatpush1.msra.mxu0 0.0
    %981 = vmatprep.subr.mxu0 0.0
    %982 = vmatpush1.msra.mxu0 0.0
    %983 = vmatprep.mubr.f32.mxu0 0.0
    %984 = vmatmul.mubr.f32.gmra.mrb[0].mxu0 %v892
    %v985 = vpop.f32.mrb[0].mxu0
    %v986 = vadd.f32 0.0, %v985
    %v987 = vpop.f32.mrb[0].mxu0
    %988 = vmatprep.mubr.f32.mxu0 0.0
    %989 = vmatmul.mubr.f32.gmra.mrb[0].mxu0 %v893
    %v990 = vpop.f32.mrb[0].mxu0
    %v991 = vadd.f32 0.0, %v990
    %v992 = vpop.f32.mrb[0].mxu0
    %993 = vmatprep.mubr.f32.mxu0 0.0
    %994 = vmatmul.mubr.f32.gmra.mrb[0].mxu0 %v896
    %v995 = vpop.f32.mrb[0].mxu0
    %v996 = vadd.f32 0.0, %v995
    %v997 = vpop.f32.mrb[0].mxu0
    %998 = vmatprep.mubr.f32.mxu0 0.0
    %999 = vmatmul.mubr.f32.gmra.mrb[0].mxu0 %v897
    %v1000 = vpop.f32.mrb[0].mxu0
    %v1001 = vadd.f32 0.0, %v1000
    %v1002 = vpop.f32.mrb[0].mxu0
    %1003 = vdwg.mxu0
    %v1004 = vadd.f32 %v872, %v986
    %v1005 = vadd.f32 %v877, %v991
    %v1006 = vadd.f32 %v882, %v996
    %v1007 = vadd.f32 %v887, %v1001
    %v1008 = vrot.slane %v671, 3
    %v1009 = vrot.slane %v664, 3
    %v1010 = vsel %vm414, %v1008, %v1009
    %v1011 = vsel %vm414, %v1009, %v1008
    %v1012 = vrot.slane %v672, 3
    %v1013 = vrot.slane %v666, 3
    %v1014 = vsel %vm414, %v1012, %v1013
    %v1015 = vsel %vm414, %v1013, %v1012
    %s1020 = scalar_lea.vmem [#allocation6], 384
    %v1021 = vld [vmem:[%s1020] sm:$0xff]
    %v1022 = vld [vmem:[%s1020 + $0x8] sm:$0xff]
    %v1023 = vld [vmem:[%s1020 + $0x10] sm:$0xff]
    %v1024 = vld [vmem:[%s1020 + $0x18] sm:$0xff]
    %v1025 = vld [vmem:[%s1020 + $0x20] sm:$0xff]
    %v1026 = vld [vmem:[%s1020 + $0x28] sm:$0xff]
    %v1027 = vld [vmem:[%s1020 + $0x30] sm:$0xff]
    %v1028 = vld [vmem:[%s1020 + $0x38] sm:$0xff]
    %v1029 = vld [vmem:[%s1020 + $0x40] sm:$0xff]
    %v1030 = vld [vmem:[%s1020 + $0x48] sm:$0xff]
    %v1031 = vld [vmem:[%s1020 + $0x50] sm:$0xff]
    %v1032 = vld [vmem:[%s1020 + $0x58] sm:$0xff]
    %v1033 = vld [vmem:[%s1020 + $0x60] sm:$0xff]
    %v1034 = vld [vmem:[%s1020 + $0x68] sm:$0xff]
    %v1035 = vld [vmem:[%s1020 + $0x70] sm:$0xff]
    %v1036 = vld [vmem:[%s1020 + $0x78] sm:$0xff]
    %1037 = vmatprep.subr.mxu0 0.0
    %1038 = vmatpush1.msra.mxu0 %v1021
    %1039 = vmatprep.subr.mxu0 0.0
    %1040 = vmatpush1.msra.mxu0 %v1022
    %1041 = vmatprep.subr.mxu0 0.0
    %1042 = vmatpush1.msra.mxu0 %v1023
    %1043 = vmatprep.subr.mxu0 0.0
    %1044 = vmatpush1.msra.mxu0 %v1024
    %1045 = vmatprep.subr.mxu0 0.0
    %1046 = vmatpush1.msra.mxu0 %v1025
    %1047 = vmatprep.subr.mxu0 0.0
    %1048 = vmatpush1.msra.mxu0 %v1026
    %1049 = vmatprep.subr.mxu0 0.0
    %1050 = vmatpush1.msra.mxu0 %v1027
    %1051 = vmatprep.subr.mxu0 0.0
    %1052 = vmatpush1.msra.mxu0 %v1028
    %1053 = vmatprep.subr.mxu0 0.0
    %1054 = vmatpush1.msra.mxu0 %v1029
    %1055 = vmatprep.subr.mxu0 0.0
    %1056 = vmatpush1.msra.mxu0 %v1030
    %1057 = vmatprep.subr.mxu0 0.0
    %1058 = vmatpush1.msra.mxu0 %v1031
    %1059 = vmatprep.subr.mxu0 0.0
    %1060 = vmatpush1.msra.mxu0 %v1032
    %1061 = vmatprep.subr.mxu0 0.0
    %1062 = vmatpush1.msra.mxu0 %v1033
    %1063 = vmatprep.subr.mxu0 0.0
    %1064 = vmatpush1.msra.mxu0 %v1034
    %1065 = vmatprep.subr.mxu0 0.0
    %1066 = vmatpush1.msra.mxu0 %v1035
    %1067 = vmatprep.subr.mxu0 0.0
    %1068 = vmatpush1.msra.mxu0 %v1036
    %1069 = vmatprep.subr.mxu0 0.0
    %1070 = vmatpush1.msra.mxu0 0.0
    %1071 = vmatprep.subr.mxu0 0.0
    %1072 = vmatpush1.msra.mxu0 0.0
    %1073 = vmatprep.subr.mxu0 0.0
    %1074 = vmatpush1.msra.mxu0 0.0
    %1075 = vmatprep.subr.mxu0 0.0
    %1076 = vmatpush1.msra.mxu0 0.0
    %1077 = vmatprep.subr.mxu0 0.0
    %1078 = vmatpush1.msra.mxu0 0.0
    %1079 = vmatprep.subr.mxu0 0.0
    %1080 = vmatpush1.msra.mxu0 0.0
    %1081 = vmatprep.subr.mxu0 0.0
    %1082 = vmatpush1.msra.mxu0 0.0
    %1083 = vmatprep.subr.mxu0 0.0
    %1084 = vmatpush1.msra.mxu0 0.0
    %1085 = vmatprep.subr.mxu0 0.0
    %1086 = vmatpush1.msra.mxu0 0.0
    %1087 = vmatprep.subr.mxu0 0.0
    %1088 = vmatpush1.msra.mxu0 0.0
    %1089 = vmatprep.subr.mxu0 0.0
    %1090 = vmatpush1.msra.mxu0 0.0
    %1091 = vmatprep.subr.mxu0 0.0
    %1092 = vmatpush1.msra.mxu0 0.0
    %1093 = vmatprep.subr.mxu0 0.0
    %1094 = vmatpush1.msra.mxu0 0.0
    %1095 = vmatprep.subr.mxu0 0.0
    %1096 = vmatpush1.msra.mxu0 0.0
    %1097 = vmatprep.subr.mxu0 0.0
    %1098 = vmatpush1.msra.mxu0 0.0
    %1099 = vmatprep.subr.mxu0 0.0
    %1100 = vmatpush1.msra.mxu0 0.0
    %1101 = vmatprep.mubr.f32.mxu0 0.0
    %1102 = vmatmul.mubr.f32.gmra.mrb[0].mxu0 %v1010
    %v1103 = vpop.f32.mrb[0].mxu0
    %v1104 = vadd.f32 0.0, %v1103
    %v1105 = vpop.f32.mrb[0].mxu0
    %1106 = vmatprep.mubr.f32.mxu0 0.0
    %1107 = vmatmul.mubr.f32.gmra.mrb[0].mxu0 %v1011
    %v1108 = vpop.f32.mrb[0].mxu0
    %v1109 = vadd.f32 0.0, %v1108
    %v1110 = vpop.f32.mrb[0].mxu0
    %1111 = vmatprep.mubr.f32.mxu0 0.0
    %1112 = vmatmul.mubr.f32.gmra.mrb[0].mxu0 %v1014
    %v1113 = vpop.f32.mrb[0].mxu0
    %v1114 = vadd.f32 0.0, %v1113
    %v1115 = vpop.f32.mrb[0].mxu0
    %1116 = vmatprep.mubr.f32.mxu0 0.0
    %1117 = vmatmul.mubr.f32.gmra.mrb[0].mxu0 %v1015
    %v1118 = vpop.f32.mrb[0].mxu0
    %v1119 = vadd.f32 0.0, %v1118
    %v1120 = vpop.f32.mrb[0].mxu0
    %1121 = vdwg.mxu0
    %v1122 = vadd.f32 %v1004, %v1104
    %v1123 = vadd.f32 %v1005, %v1109
    %v1124 = vadd.f32 %v1006, %v1114
    %v1125 = vadd.f32 %v1007, %v1119
    %v1126 = vrot.slane %v671, 4
    %v1127 = vrot.slane %v664, 4
    %v1128 = vsel %vm523, %v1126, %v1127
    %v1129 = vsel %vm523, %v1127, %v1126
    %v1130 = vrot.slane %v672, 4
    %v1131 = vrot.slane %v666, 4
    %v1132 = vsel %vm523, %v1130, %v1131
    %v1133 = vsel %vm523, %v1131, %v1130
    %s1138 = scalar_lea.vmem [#allocation6], 512
    %v1139 = vld [vmem:[%s1138] sm:$0xff]
    %v1140 = vld [vmem:[%s1138 + $0x8] sm:$0xff]
    %v1141 = vld [vmem:[%s1138 + $0x10] sm:$0xff]
    %v1142 = vld [vmem:[%s1138 + $0x18] sm:$0xff]
    %v1143 = vld [vmem:[%s1138 + $0x20] sm:$0xff]
    %v1144 = vld [vmem:[%s1138 + $0x28] sm:$0xff]
    %v1145 = vld [vmem:[%s1138 + $0x30] sm:$0xff]
    %v1146 = vld [vmem:[%s1138 + $0x38] sm:$0xff]
    %v1147 = vld [vmem:[%s1138 + $0x40] sm:$0xff]
    %v1148 = vld [vmem:[%s1138 + $0x48] sm:$0xff]
    %v1149 = vld [vmem:[%s1138 + $0x50] sm:$0xff]
    %v1150 = vld [vmem:[%s1138 + $0x58] sm:$0xff]
    %v1151 = vld [vmem:[%s1138 + $0x60] sm:$0xff]
    %v1152 = vld [vmem:[%s1138 + $0x68] sm:$0xff]
    %v1153 = vld [vmem:[%s1138 + $0x70] sm:$0xff]
    %v1154 = vld [vmem:[%s1138 + $0x78] sm:$0xff]
    %1155 = vmatprep.subr.mxu0 0.0
    %1156 = vmatpush1.msra.mxu0 %v1139
    %1157 = vmatprep.subr.mxu0 0.0
    %1158 = vmatpush1.msra.mxu0 %v1140
    %1159 = vmatprep.subr.mxu0 0.0
    %1160 = vmatpush1.msra.mxu0 %v1141
    %1161 = vmatprep.subr.mxu0 0.0
    %1162 = vmatpush1.msra.mxu0 %v1142
    %1163 = vmatprep.subr.mxu0 0.0
    %1164 = vmatpush1.msra.mxu0 %v1143
    %1165 = vmatprep.subr.mxu0 0.0
    %1166 = vmatpush1.msra.mxu0 %v1144
    %1167 = vmatprep.subr.mxu0 0.0
    %1168 = vmatpush1.msra.mxu0 %v1145
    %1169 = vmatprep.subr.mxu0 0.0
    %1170 = vmatpush1.msra.mxu0 %v1146
    %1171 = vmatprep.subr.mxu0 0.0
    %1172 = vmatpush1.msra.mxu0 %v1147
    %1173 = vmatprep.subr.mxu0 0.0
    %1174 = vmatpush1.msra.mxu0 %v1148
    %1175 = vmatprep.subr.mxu0 0.0
    %1176 = vmatpush1.msra.mxu0 %v1149
    %1177 = vmatprep.subr.mxu0 0.0
    %1178 = vmatpush1.msra.mxu0 %v1150
    %1179 = vmatprep.subr.mxu0 0.0
    %1180 = vmatpush1.msra.mxu0 %v1151
    %1181 = vmatprep.subr.mxu0 0.0
    %1182 = vmatpush1.msra.mxu0 %v1152
    %1183 = vmatprep.subr.mxu0 0.0
    %1184 = vmatpush1.msra.mxu0 %v1153
    %1185 = vmatprep.subr.mxu0 0.0
    %1186 = vmatpush1.msra.mxu0 %v1154
    %1187 = vmatprep.subr.mxu0 0.0
    %1188 = vmatpush1.msra.mxu0 0.0
    %1189 = vmatprep.subr.mxu0 0.0
    %1190 = vmatpush1.msra.mxu0 0.0
    %1191 = vmatprep.subr.mxu0 0.0
    %1192 = vmatpush1.msra.mxu0 0.0
    %1193 = vmatprep.subr.mxu0 0.0
    %1194 = vmatpush1.msra.mxu0 0.0
    %1195 = vmatprep.subr.mxu0 0.0
    %1196 = vmatpush1.msra.mxu0 0.0
    %1197 = vmatprep.subr.mxu0 0.0
    %1198 = vmatpush1.msra.mxu0 0.0
    %1199 = vmatprep.subr.mxu0 0.0
    %1200 = vmatpush1.msra.mxu0 0.0
    %1201 = vmatprep.subr.mxu0 0.0
    %1202 = vmatpush1.msra.mxu0 0.0
    %1203 = vmatprep.subr.mxu0 0.0
    %1204 = vmatpush1.msra.mxu0 0.0
    %1205 = vmatprep.subr.mxu0 0.0
    %1206 = vmatpush1.msra.mxu0 0.0
    %1207 = vmatprep.subr.mxu0 0.0
    %1208 = vmatpush1.msra.mxu0 0.0
    %1209 = vmatprep.subr.mxu0 0.0
    %1210 = vmatpush1.msra.mxu0 0.0
    %1211 = vmatprep.subr.mxu0 0.0
    %1212 = vmatpush1.msra.mxu0 0.0
    %1213 = vmatprep.subr.mxu0 0.0
    %1214 = vmatpush1.msra.mxu0 0.0
    %1215 = vmatprep.subr.mxu0 0.0
    %1216 = vmatpush1.msra.mxu0 0.0
    %1217 = vmatprep.subr.mxu0 0.0
    %1218 = vmatpush1.msra.mxu0 0.0
    %1219 = vmatprep.mubr.f32.mxu0 0.0
    %1220 = vmatmul.mubr.f32.gmra.mrb[0].mxu0 %v1128
    %v1221 = vpop.f32.mrb[0].mxu0
    %v1222 = vadd.f32 0.0, %v1221
    %v1223 = vpop.f32.mrb[0].mxu0
    %1224 = vmatprep.mubr.f32.mxu0 0.0
    %1225 = vmatmul.mubr.f32.gmra.mrb[0].mxu0 %v1129
    %v1226 = vpop.f32.mrb[0].mxu0
    %v1227 = vadd.f32 0.0, %v1226
    %v1228 = vpop.f32.mrb[0].mxu0
    %1229 = vmatprep.mubr.f32.mxu0 0.0
    %1230 = vmatmul.mubr.f32.gmra.mrb[0].mxu0 %v1132
    %v1231 = vpop.f32.mrb[0].mxu0
    %v1232 = vadd.f32 0.0, %v1231
    %v1233 = vpop.f32.mrb[0].mxu0
    %1234 = vmatprep.mubr.f32.mxu0 0.0
    %1235 = vmatmul.mubr.f32.gmra.mrb[0].mxu0 %v1133
    %v1236 = vpop.f32.mrb[0].mxu0
    %v1237 = vadd.f32 0.0, %v1236
    %v1238 = vpop.f32.mrb[0].mxu0
    %1239 = vdwg.mxu0
    %v1240 = vadd.f32 %v1122, %v1222
    %v1241 = vadd.f32 %v1123, %v1227
    %v1242 = vadd.f32 %v1124, %v1232
    %v1243 = vadd.f32 %v1125, %v1237
    %v1244 = vld [vmem:[%s4] sm:$0x1]
    %v1246 = vlaneseq
    %v1247 = vshrl.u32 %v1246, 7
    %v1248 = vsub.s32 0, %v1247
    %v1249 = vrot.slane %v1244, %v1248
    %v1251 = vadd.f32 %v1240, %v1249
    %v1252 = vadd.f32 %v1241, %v1249
    %v1253 = vadd.f32 %v1242, %v1249
    %v1254 = vadd.f32 %v1243, %v1249
    %vm1255 = vcmp.ge.f32.partialorder %v1251, 0.0
    %vm1256 = vcmp.ge.f32.partialorder %v1252, 0.0
    %vm1257 = vcmp.ge.f32.partialorder %v1253, 0.0
    %vm1258 = vcmp.ge.f32.partialorder %v1254, 0.0
    %v1259 = vmul.f32 %v1251, 0.01
    %v1260 = vmul.f32 %v1252, 0.01
    %v1261 = vmul.f32 %v1253, 0.01
    %v1262 = vmul.f32 %v1254, 0.01
    %v1263 = vsel %vm1255, %v1251, %v1259
    %v1264 = vsel %vm1256, %v1252, %v1260
    %v1265 = vsel %vm1257, %v1253, %v1261
    %v1266 = vsel %vm1258, %v1254, %v1262
    %v1269 = vrot.slane %v1264, 6
    %v1270 = vrot.slane %v1266, 6
    %v1275 = vrot.slane %v1263, 6
    %v1276 = vsel %vm93, %v1275, %v1269
    %v1277 = vrot.slane %v1265, 6
    %v1278 = vsel %vm93, %v1277, %v1270
    %v1283 = vsel %vm93, %v1269, %v1275
    %v1284 = vsel %vm93, %v1270, %v1277
    %v1285 = vld [vmem:[#allocation7] sm:$0xff]
    %v1286 = vld [vmem:[#allocation7 + $0x8] sm:$0xff]
    %v1287 = vld [vmem:[#allocation7 + $0x10] sm:$0xff]
    %v1288 = vld [vmem:[#allocation7 + $0x18] sm:$0xff]
    %v1289 = vld [vmem:[#allocation7 + $0x20] sm:$0xff]
    %v1290 = vld [vmem:[#allocation7 + $0x28] sm:$0xff]
    %v1291 = vld [vmem:[#allocation7 + $0x30] sm:$0xff]
    %v1292 = vld [vmem:[#allocation7 + $0x38] sm:$0xff]
    %v1293 = vld [vmem:[#allocation7 + $0x40] sm:$0xff]
    %v1294 = vld [vmem:[#allocation7 + $0x48] sm:$0xff]
    %v1295 = vld [vmem:[#allocation7 + $0x50] sm:$0xff]
    %v1296 = vld [vmem:[#allocation7 + $0x58] sm:$0xff]
    %v1297 = vld [vmem:[#allocation7 + $0x60] sm:$0xff]
    %v1298 = vld [vmem:[#allocation7 + $0x68] sm:$0xff]
    %v1299 = vld [vmem:[#allocation7 + $0x70] sm:$0xff]
    %v1300 = vld [vmem:[#allocation7 + $0x78] sm:$0xff]
    %v1303 = vrot.slane %v1283, 1
    %v1304 = vrot.slane %v1276, 1
    %v1305 = vsel %vm106, %v1303, %v1304
    %v1306 = vsel %vm106, %v1304, %v1303
    %v1307 = vrot.slane %v1284, 1
    %v1308 = vrot.slane %v1278, 1
    %v1309 = vsel %vm106, %v1307, %v1308
    %v1310 = vsel %vm106, %v1308, %v1307
    %s1315 = scalar_lea.vmem [#allocation7], 128
    %v1316 = vld [vmem:[%s1315] sm:$0xff]
    %v1317 = vld [vmem:[%s1315 + $0x8] sm:$0xff]
    %v1318 = vld [vmem:[%s1315 + $0x10] sm:$0xff]
    %v1319 = vld [vmem:[%s1315 + $0x18] sm:$0xff]
    %v1320 = vld [vmem:[%s1315 + $0x20] sm:$0xff]
    %v1321 = vld [vmem:[%s1315 + $0x28] sm:$0xff]
    %v1322 = vld [vmem:[%s1315 + $0x30] sm:$0xff]
    %v1323 = vld [vmem:[%s1315 + $0x38] sm:$0xff]
    %v1324 = vld [vmem:[%s1315 + $0x40] sm:$0xff]
    %v1325 = vld [vmem:[%s1315 + $0x48] sm:$0xff]
    %v1326 = vld [vmem:[%s1315 + $0x50] sm:$0xff]
    %v1327 = vld [vmem:[%s1315 + $0x58] sm:$0xff]
    %v1328 = vld [vmem:[%s1315 + $0x60] sm:$0xff]
    %v1329 = vld [vmem:[%s1315 + $0x68] sm:$0xff]
    %v1330 = vld [vmem:[%s1315 + $0x70] sm:$0xff]
    %v1331 = vld [vmem:[%s1315 + $0x78] sm:$0xff]
    %1332 = vmatprep.subr.mxu0 0.0
    %1333 = vmatpush1.msra.mxu0 %v1316
    %1334 = vmatprep.subr.mxu0 0.0
    %1335 = vmatpush1.msra.mxu0 %v1317
    %1336 = vmatprep.subr.mxu0 0.0
    %1337 = vmatpush1.msra.mxu0 %v1318
    %1338 = vmatprep.subr.mxu0 0.0
    %1339 = vmatpush1.msra.mxu0 %v1319
    %1340 = vmatprep.subr.mxu0 0.0
    %1341 = vmatpush1.msra.mxu0 %v1320
    %1342 = vmatprep.subr.mxu0 0.0
    %1343 = vmatpush1.msra.mxu0 %v1321
    %1344 = vmatprep.subr.mxu0 0.0
    %1345 = vmatpush1.msra.mxu0 %v1322
    %1346 = vmatprep.subr.mxu0 0.0
    %1347 = vmatpush1.msra.mxu0 %v1323
    %1348 = vmatprep.subr.mxu0 0.0
    %1349 = vmatpush1.msra.mxu0 %v1324
    %1350 = vmatprep.subr.mxu0 0.0
    %1351 = vmatpush1.msra.mxu0 %v1325
    %1352 = vmatprep.subr.mxu0 0.0
    %1353 = vmatpush1.msra.mxu0 %v1326
    %1354 = vmatprep.subr.mxu0 0.0
    %1355 = vmatpush1.msra.mxu0 %v1327
    %1356 = vmatprep.subr.mxu0 0.0
    %1357 = vmatpush1.msra.mxu0 %v1328
    %1358 = vmatprep.subr.mxu0 0.0
    %1359 = vmatpush1.msra.mxu0 %v1329
    %1360 = vmatprep.subr.mxu0 0.0
    %1361 = vmatpush1.msra.mxu0 %v1330
    %1362 = vmatprep.subr.mxu0 0.0
    %1363 = vmatpush1.msra.mxu0 %v1331
    %1364 = vmatprep.subr.mxu0 0.0
    %1365 = vmatpush1.msra.mxu0 0.0
    %1366 = vmatprep.subr.mxu0 0.0
    %1367 = vmatpush1.msra.mxu0 0.0
    %1368 = vmatprep.subr.mxu0 0.0
    %1369 = vmatpush1.msra.mxu0 0.0
    %1370 = vmatprep.subr.mxu0 0.0
    %1371 = vmatpush1.msra.mxu0 0.0
    %1372 = vmatprep.subr.mxu0 0.0
    %1373 = vmatpush1.msra.mxu0 0.0
    %1374 = vmatprep.subr.mxu0 0.0
    %1375 = vmatpush1.msra.mxu0 0.0
    %1376 = vmatprep.subr.mxu0 0.0
    %1377 = vmatpush1.msra.mxu0 0.0
    %1378 = vmatprep.subr.mxu0 0.0
    %1379 = vmatpush1.msra.mxu0 0.0
    %1380 = vmatprep.subr.mxu0 0.0
    %1381 = vmatpush1.msra.mxu0 0.0
    %1382 = vmatprep.subr.mxu0 0.0
    %1383 = vmatpush1.msra.mxu0 0.0
    %1384 = vmatprep.subr.mxu0 0.0
    %1385 = vmatpush1.msra.mxu0 0.0
    %1386 = vmatprep.subr.mxu0 0.0
    %1387 = vmatpush1.msra.mxu0 0.0
    %1388 = vmatprep.subr.mxu0 0.0
    %1389 = vmatpush1.msra.mxu0 0.0
    %1390 = vmatprep.subr.mxu0 0.0
    %1391 = vmatpush1.msra.mxu0 0.0
    %1392 = vmatprep.subr.mxu0 0.0
    %1393 = vmatpush1.msra.mxu0 0.0
    %1394 = vmatprep.subr.mxu0 0.0
    %1395 = vmatpush1.msra.mxu0 0.0
    %1396 = vmatprep.mubr.f32.mxu0 0.0
    %1397 = vmatmul.mubr.f32.gmra.mrb[0].mxu0 %v1305
    %v1398 = vpop.f32.mrb[0].mxu0
    %v1399 = vadd.f32 0.0, %v1398
    %v1400 = vpop.f32.mrb[0].mxu0
    %1401 = vmatprep.mubr.f32.mxu0 0.0
    %1402 = vmatmul.mubr.f32.gmra.mrb[0].mxu0 %v1306
    %v1403 = vpop.f32.mrb[0].mxu0
    %v1404 = vadd.f32 0.0, %v1403
    %v1405 = vpop.f32.mrb[0].mxu0
    %1406 = vmatprep.mubr.f32.mxu0 0.0
    %1407 = vmatmul.mubr.f32.gmra.mrb[0].mxu0 %v1309
    %v1408 = vpop.f32.mrb[0].mxu0
    %v1409 = vadd.f32 0.0, %v1408
    %v1410 = vpop.f32.mrb[0].mxu0
    %1411 = vmatprep.mubr.f32.mxu0 0.0
    %1412 = vmatmul.mubr.f32.gmra.mrb[0].mxu0 %v1310
    %v1413 = vpop.f32.mrb[0].mxu0
    %v1414 = vadd.f32 0.0, %v1413
    %v1415 = vpop.f32.mrb[0].mxu0
    %1416 = vdwg.mxu0
    %1417 = vmatprep.subr.mxu0 0.0
    %1418 = vmatpush1.msra.mxu0 %v1285
    %1419 = vmatprep.subr.mxu0 0.0
    %1420 = vmatpush1.msra.mxu0 %v1286
    %1421 = vmatprep.subr.mxu0 0.0
    %1422 = vmatpush1.msra.mxu0 %v1287
    %1423 = vmatprep.subr.mxu0 0.0
    %1424 = vmatpush1.msra.mxu0 %v1288
    %1425 = vmatprep.subr.mxu0 0.0
    %1426 = vmatpush1.msra.mxu0 %v1289
    %1427 = vmatprep.subr.mxu0 0.0
    %1428 = vmatpush1.msra.mxu0 %v1290
    %1429 = vmatprep.subr.mxu0 0.0
    %1430 = vmatpush1.msra.mxu0 %v1291
    %1431 = vmatprep.subr.mxu0 0.0
    %1432 = vmatpush1.msra.mxu0 %v1292
    %1433 = vmatprep.subr.mxu0 0.0
    %1434 = vmatpush1.msra.mxu0 %v1293
    %1435 = vmatprep.subr.mxu0 0.0
    %1436 = vmatpush1.msra.mxu0 %v1294
    %1437 = vmatprep.subr.mxu0 0.0
    %1438 = vmatpush1.msra.mxu0 %v1295
    %1439 = vmatprep.subr.mxu0 0.0
    %1440 = vmatpush1.msra.mxu0 %v1296
    %1441 = vmatprep.subr.mxu0 0.0
    %1442 = vmatpush1.msra.mxu0 %v1297
    %1443 = vmatprep.subr.mxu0 0.0
    %1444 = vmatpush1.msra.mxu0 %v1298
    %1445 = vmatprep.subr.mxu0 0.0
    %1446 = vmatpush1.msra.mxu0 %v1299
    %1447 = vmatprep.subr.mxu0 0.0
    %1448 = vmatpush1.msra.mxu0 %v1300
    %1449 = vmatprep.subr.mxu0 0.0
    %1450 = vmatpush1.msra.mxu0 0.0
    %1451 = vmatprep.subr.mxu0 0.0
    %1452 = vmatpush1.msra.mxu0 0.0
    %1453 = vmatprep.subr.mxu0 0.0
    %1454 = vmatpush1.msra.mxu0 0.0
    %1455 = vmatprep.subr.mxu0 0.0
    %1456 = vmatpush1.msra.mxu0 0.0
    %1457 = vmatprep.subr.mxu0 0.0
    %1458 = vmatpush1.msra.mxu0 0.0
    %1459 = vmatprep.subr.mxu0 0.0
    %1460 = vmatpush1.msra.mxu0 0.0
    %1461 = vmatprep.subr.mxu0 0.0
    %1462 = vmatpush1.msra.mxu0 0.0
    %1463 = vmatprep.subr.mxu0 0.0
    %1464 = vmatpush1.msra.mxu0 0.0
    %1465 = vmatprep.subr.mxu0 0.0
    %1466 = vmatpush1.msra.mxu0 0.0
    %1467 = vmatprep.subr.mxu0 0.0
    %1468 = vmatpush1.msra.mxu0 0.0
    %1469 = vmatprep.subr.mxu0 0.0
    %1470 = vmatpush1.msra.mxu0 0.0
    %1471 = vmatprep.subr.mxu0 0.0
    %1472 = vmatpush1.msra.mxu0 0.0
    %1473 = vmatprep.subr.mxu0 0.0
    %1474 = vmatpush1.msra.mxu0 0.0
    %1475 = vmatprep.subr.mxu0 0.0
    %1476 = vmatpush1.msra.mxu0 0.0
    %1477 = vmatprep.subr.mxu0 0.0
    %1478 = vmatpush1.msra.mxu0 0.0
    %1479 = vmatprep.subr.mxu0 0.0
    %1480 = vmatpush1.msra.mxu0 0.0
    %1481 = vmatprep.mubr.f32.mxu0 0.0
    %1482 = vmatmul.mubr.f32.gmra.mrb[0].mxu0 %v1283
    %v1483 = vpop.f32.mrb[0].mxu0
    %v1484 = vadd.f32 %v1399, %v1483
    %v1485 = vpop.f32.mrb[0].mxu0
    %1486 = vmatprep.mubr.f32.mxu0 0.0
    %1487 = vmatmul.mubr.f32.gmra.mrb[0].mxu0 %v1276
    %v1488 = vpop.f32.mrb[0].mxu0
    %v1489 = vadd.f32 %v1404, %v1488
    %v1490 = vpop.f32.mrb[0].mxu0
    %1491 = vmatprep.mubr.f32.mxu0 0.0
    %1492 = vmatmul.mubr.f32.gmra.mrb[0].mxu0 %v1284
    %v1493 = vpop.f32.mrb[0].mxu0
    %v1494 = vadd.f32 %v1409, %v1493
    %v1495 = vpop.f32.mrb[0].mxu0
    %1496 = vmatprep.mubr.f32.mxu0 0.0
    %1497 = vmatmul.mubr.f32.gmra.mrb[0].mxu0 %v1278
    %v1498 = vpop.f32.mrb[0].mxu0
    %v1499 = vadd.f32 %v1414, %v1498
    %v1500 = vpop.f32.mrb[0].mxu0
    %1501 = vdwg.mxu0
    %v1502 = vrot.slane %v1283, 2
    %v1503 = vrot.slane %v1276, 2
    %v1504 = vsel %vm305, %v1502, %v1503
    %v1505 = vsel %vm305, %v1503, %v1502
    %v1506 = vrot.slane %v1284, 2
    %v1507 = vrot.slane %v1278, 2
    %v1508 = vsel %vm305, %v1506, %v1507
    %v1509 = vsel %vm305, %v1507, %v1506
    %s1514 = scalar_lea.vmem [#allocation7], 256
    %v1515 = vld [vmem:[%s1514] sm:$0xff]
    %v1516 = vld [vmem:[%s1514 + $0x8] sm:$0xff]
    %v1517 = vld [vmem:[%s1514 + $0x10] sm:$0xff]
    %v1518 = vld [vmem:[%s1514 + $0x18] sm:$0xff]
    %v1519 = vld [vmem:[%s1514 + $0x20] sm:$0xff]
    %v1520 = vld [vmem:[%s1514 + $0x28] sm:$0xff]
    %v1521 = vld [vmem:[%s1514 + $0x30] sm:$0xff]
    %v1522 = vld [vmem:[%s1514 + $0x38] sm:$0xff]
    %v1523 = vld [vmem:[%s1514 + $0x40] sm:$0xff]
    %v1524 = vld [vmem:[%s1514 + $0x48] sm:$0xff]
    %v1525 = vld [vmem:[%s1514 + $0x50] sm:$0xff]
    %v1526 = vld [vmem:[%s1514 + $0x58] sm:$0xff]
    %v1527 = vld [vmem:[%s1514 + $0x60] sm:$0xff]
    %v1528 = vld [vmem:[%s1514 + $0x68] sm:$0xff]
    %v1529 = vld [vmem:[%s1514 + $0x70] sm:$0xff]
    %v1530 = vld [vmem:[%s1514 + $0x78] sm:$0xff]
    %1531 = vmatprep.subr.mxu0 0.0
    %1532 = vmatpush1.msra.mxu0 %v1515
    %1533 = vmatprep.subr.mxu0 0.0
    %1534 = vmatpush1.msra.mxu0 %v1516
    %1535 = vmatprep.subr.mxu0 0.0
    %1536 = vmatpush1.msra.mxu0 %v1517
    %1537 = vmatprep.subr.mxu0 0.0
    %1538 = vmatpush1.msra.mxu0 %v1518
    %1539 = vmatprep.subr.mxu0 0.0
    %1540 = vmatpush1.msra.mxu0 %v1519
    %1541 = vmatprep.subr.mxu0 0.0
    %1542 = vmatpush1.msra.mxu0 %v1520
    %1543 = vmatprep.subr.mxu0 0.0
    %1544 = vmatpush1.msra.mxu0 %v1521
    %1545 = vmatprep.subr.mxu0 0.0
    %1546 = vmatpush1.msra.mxu0 %v1522
    %1547 = vmatprep.subr.mxu0 0.0
    %1548 = vmatpush1.msra.mxu0 %v1523
    %1549 = vmatprep.subr.mxu0 0.0
    %1550 = vmatpush1.msra.mxu0 %v1524
    %1551 = vmatprep.subr.mxu0 0.0
    %1552 = vmatpush1.msra.mxu0 %v1525
    %1553 = vmatprep.subr.mxu0 0.0
    %1554 = vmatpush1.msra.mxu0 %v1526
    %1555 = vmatprep.subr.mxu0 0.0
    %1556 = vmatpush1.msra.mxu0 %v1527
    %1557 = vmatprep.subr.mxu0 0.0
    %1558 = vmatpush1.msra.mxu0 %v1528
    %1559 = vmatprep.subr.mxu0 0.0
    %1560 = vmatpush1.msra.mxu0 %v1529
    %1561 = vmatprep.subr.mxu0 0.0
    %1562 = vmatpush1.msra.mxu0 %v1530
    %1563 = vmatprep.subr.mxu0 0.0
    %1564 = vmatpush1.msra.mxu0 0.0
    %1565 = vmatprep.subr.mxu0 0.0
    %1566 = vmatpush1.msra.mxu0 0.0
    %1567 = vmatprep.subr.mxu0 0.0
    %1568 = vmatpush1.msra.mxu0 0.0
    %1569 = vmatprep.subr.mxu0 0.0
    %1570 = vmatpush1.msra.mxu0 0.0
    %1571 = vmatprep.subr.mxu0 0.0
    %1572 = vmatpush1.msra.mxu0 0.0
    %1573 = vmatprep.subr.mxu0 0.0
    %1574 = vmatpush1.msra.mxu0 0.0
    %1575 = vmatprep.subr.mxu0 0.0
    %1576 = vmatpush1.msra.mxu0 0.0
    %1577 = vmatprep.subr.mxu0 0.0
    %1578 = vmatpush1.msra.mxu0 0.0
    %1579 = vmatprep.subr.mxu0 0.0
    %1580 = vmatpush1.msra.mxu0 0.0
    %1581 = vmatprep.subr.mxu0 0.0
    %1582 = vmatpush1.msra.mxu0 0.0
    %1583 = vmatprep.subr.mxu0 0.0
    %1584 = vmatpush1.msra.mxu0 0.0
    %1585 = vmatprep.subr.mxu0 0.0
    %1586 = vmatpush1.msra.mxu0 0.0
    %1587 = vmatprep.subr.mxu0 0.0
    %1588 = vmatpush1.msra.mxu0 0.0
    %1589 = vmatprep.subr.mxu0 0.0
    %1590 = vmatpush1.msra.mxu0 0.0
    %1591 = vmatprep.subr.mxu0 0.0
    %1592 = vmatpush1.msra.mxu0 0.0
    %1593 = vmatprep.subr.mxu0 0.0
    %1594 = vmatpush1.msra.mxu0 0.0
    %1595 = vmatprep.mubr.f32.mxu0 0.0
    %1596 = vmatmul.mubr.f32.gmra.mrb[0].mxu0 %v1504
    %v1597 = vpop.f32.mrb[0].mxu0
    %v1598 = vadd.f32 0.0, %v1597
    %v1599 = vpop.f32.mrb[0].mxu0
    %1600 = vmatprep.mubr.f32.mxu0 0.0
    %1601 = vmatmul.mubr.f32.gmra.mrb[0].mxu0 %v1505
    %v1602 = vpop.f32.mrb[0].mxu0
    %v1603 = vadd.f32 0.0, %v1602
    %v1604 = vpop.f32.mrb[0].mxu0
    %1605 = vmatprep.mubr.f32.mxu0 0.0
    %1606 = vmatmul.mubr.f32.gmra.mrb[0].mxu0 %v1508
    %v1607 = vpop.f32.mrb[0].mxu0
    %v1608 = vadd.f32 0.0, %v1607
    %v1609 = vpop.f32.mrb[0].mxu0
    %1610 = vmatprep.mubr.f32.mxu0 0.0
    %1611 = vmatmul.mubr.f32.gmra.mrb[0].mxu0 %v1509
    %v1612 = vpop.f32.mrb[0].mxu0
    %v1613 = vadd.f32 0.0, %v1612
    %v1614 = vpop.f32.mrb[0].mxu0
    %1615 = vdwg.mxu0
    %v1616 = vadd.f32 %v1484, %v1598
    %v1617 = vadd.f32 %v1489, %v1603
    %v1618 = vadd.f32 %v1494, %v1608
    %v1619 = vadd.f32 %v1499, %v1613
    %v1620 = vrot.slane %v1283, 3
    %v1621 = vrot.slane %v1276, 3
    %v1622 = vsel %vm414, %v1620, %v1621
    %v1623 = vsel %vm414, %v1621, %v1620
    %v1624 = vrot.slane %v1284, 3
    %v1625 = vrot.slane %v1278, 3
    %v1626 = vsel %vm414, %v1624, %v1625
    %v1627 = vsel %vm414, %v1625, %v1624
    %s1632 = scalar_lea.vmem [#allocation7], 384
    %v1633 = vld [vmem:[%s1632] sm:$0xff]
    %v1634 = vld [vmem:[%s1632 + $0x8] sm:$0xff]
    %v1635 = vld [vmem:[%s1632 + $0x10] sm:$0xff]
    %v1636 = vld [vmem:[%s1632 + $0x18] sm:$0xff]
    %v1637 = vld [vmem:[%s1632 + $0x20] sm:$0xff]
    %v1638 = vld [vmem:[%s1632 + $0x28] sm:$0xff]
    %v1639 = vld [vmem:[%s1632 + $0x30] sm:$0xff]
    %v1640 = vld [vmem:[%s1632 + $0x38] sm:$0xff]
    %v1641 = vld [vmem:[%s1632 + $0x40] sm:$0xff]
    %v1642 = vld [vmem:[%s1632 + $0x48] sm:$0xff]
    %v1643 = vld [vmem:[%s1632 + $0x50] sm:$0xff]
    %v1644 = vld [vmem:[%s1632 + $0x58] sm:$0xff]
    %v1645 = vld [vmem:[%s1632 + $0x60] sm:$0xff]
    %v1646 = vld [vmem:[%s1632 + $0x68] sm:$0xff]
    %v1647 = vld [vmem:[%s1632 + $0x70] sm:$0xff]
    %v1648 = vld [vmem:[%s1632 + $0x78] sm:$0xff]
    %1649 = vmatprep.subr.mxu0 0.0
    %1650 = vmatpush1.msra.mxu0 %v1633
    %1651 = vmatprep.subr.mxu0 0.0
    %1652 = vmatpush1.msra.mxu0 %v1634
    %1653 = vmatprep.subr.mxu0 0.0
    %1654 = vmatpush1.msra.mxu0 %v1635
    %1655 = vmatprep.subr.mxu0 0.0
    %1656 = vmatpush1.msra.mxu0 %v1636
    %1657 = vmatprep.subr.mxu0 0.0
    %1658 = vmatpush1.msra.mxu0 %v1637
    %1659 = vmatprep.subr.mxu0 0.0
    %1660 = vmatpush1.msra.mxu0 %v1638
    %1661 = vmatprep.subr.mxu0 0.0
    %1662 = vmatpush1.msra.mxu0 %v1639
    %1663 = vmatprep.subr.mxu0 0.0
    %1664 = vmatpush1.msra.mxu0 %v1640
    %1665 = vmatprep.subr.mxu0 0.0
    %1666 = vmatpush1.msra.mxu0 %v1641
    %1667 = vmatprep.subr.mxu0 0.0
    %1668 = vmatpush1.msra.mxu0 %v1642
    %1669 = vmatprep.subr.mxu0 0.0
    %1670 = vmatpush1.msra.mxu0 %v1643
    %1671 = vmatprep.subr.mxu0 0.0
    %1672 = vmatpush1.msra.mxu0 %v1644
    %1673 = vmatprep.subr.mxu0 0.0
    %1674 = vmatpush1.msra.mxu0 %v1645
    %1675 = vmatprep.subr.mxu0 0.0
    %1676 = vmatpush1.msra.mxu0 %v1646
    %1677 = vmatprep.subr.mxu0 0.0
    %1678 = vmatpush1.msra.mxu0 %v1647
    %1679 = vmatprep.subr.mxu0 0.0
    %1680 = vmatpush1.msra.mxu0 %v1648
    %1681 = vmatprep.subr.mxu0 0.0
    %1682 = vmatpush1.msra.mxu0 0.0
    %1683 = vmatprep.subr.mxu0 0.0
    %1684 = vmatpush1.msra.mxu0 0.0
    %1685 = vmatprep.subr.mxu0 0.0
    %1686 = vmatpush1.msra.mxu0 0.0
    %1687 = vmatprep.subr.mxu0 0.0
    %1688 = vmatpush1.msra.mxu0 0.0
    %1689 = vmatprep.subr.mxu0 0.0
    %1690 = vmatpush1.msra.mxu0 0.0
    %1691 = vmatprep.subr.mxu0 0.0
    %1692 = vmatpush1.msra.mxu0 0.0
    %1693 = vmatprep.subr.mxu0 0.0
    %1694 = vmatpush1.msra.mxu0 0.0
    %1695 = vmatprep.subr.mxu0 0.0
    %1696 = vmatpush1.msra.mxu0 0.0
    %1697 = vmatprep.subr.mxu0 0.0
    %1698 = vmatpush1.msra.mxu0 0.0
    %1699 = vmatprep.subr.mxu0 0.0
    %1700 = vmatpush1.msra.mxu0 0.0
    %1701 = vmatprep.subr.mxu0 0.0
    %1702 = vmatpush1.msra.mxu0 0.0
    %1703 = vmatprep.subr.mxu0 0.0
    %1704 = vmatpush1.msra.mxu0 0.0
    %1705 = vmatprep.subr.mxu0 0.0
    %1706 = vmatpush1.msra.mxu0 0.0
    %1707 = vmatprep.subr.mxu0 0.0
    %1708 = vmatpush1.msra.mxu0 0.0
    %1709 = vmatprep.subr.mxu0 0.0
    %1710 = vmatpush1.msra.mxu0 0.0
    %1711 = vmatprep.subr.mxu0 0.0
    %1712 = vmatpush1.msra.mxu0 0.0
    %1713 = vmatprep.mubr.f32.mxu0 0.0
    %1714 = vmatmul.mubr.f32.gmra.mrb[0].mxu0 %v1622
    %v1715 = vpop.f32.mrb[0].mxu0
    %v1716 = vadd.f32 0.0, %v1715
    %v1717 = vpop.f32.mrb[0].mxu0
    %1718 = vmatprep.mubr.f32.mxu0 0.0
    %1719 = vmatmul.mubr.f32.gmra.mrb[0].mxu0 %v1623
    %v1720 = vpop.f32.mrb[0].mxu0
    %v1721 = vadd.f32 0.0, %v1720
    %v1722 = vpop.f32.mrb[0].mxu0
    %1723 = vmatprep.mubr.f32.mxu0 0.0
    %1724 = vmatmul.mubr.f32.gmra.mrb[0].mxu0 %v1626
    %v1725 = vpop.f32.mrb[0].mxu0
    %v1726 = vadd.f32 0.0, %v1725
    %v1727 = vpop.f32.mrb[0].mxu0
    %1728 = vmatprep.mubr.f32.mxu0 0.0
    %1729 = vmatmul.mubr.f32.gmra.mrb[0].mxu0 %v1627
    %v1730 = vpop.f32.mrb[0].mxu0
    %v1731 = vadd.f32 0.0, %v1730
    %v1732 = vpop.f32.mrb[0].mxu0
    %1733 = vdwg.mxu0
    %v1734 = vadd.f32 %v1616, %v1716
    %v1735 = vadd.f32 %v1617, %v1721
    %v1736 = vadd.f32 %v1618, %v1726
    %v1737 = vadd.f32 %v1619, %v1731
    %v1738 = vrot.slane %v1283, 4
    %v1739 = vrot.slane %v1276, 4
    %v1740 = vsel %vm523, %v1738, %v1739
    %v1741 = vsel %vm523, %v1739, %v1738
    %v1742 = vrot.slane %v1284, 4
    %v1743 = vrot.slane %v1278, 4
    %v1744 = vsel %vm523, %v1742, %v1743
    %v1745 = vsel %vm523, %v1743, %v1742
    %s1750 = scalar_lea.vmem [#allocation7], 512
    %v1751 = vld [vmem:[%s1750] sm:$0xff]
    %v1752 = vld [vmem:[%s1750 + $0x8] sm:$0xff]
    %v1753 = vld [vmem:[%s1750 + $0x10] sm:$0xff]
    %v1754 = vld [vmem:[%s1750 + $0x18] sm:$0xff]
    %v1755 = vld [vmem:[%s1750 + $0x20] sm:$0xff]
    %v1756 = vld [vmem:[%s1750 + $0x28] sm:$0xff]
    %v1757 = vld [vmem:[%s1750 + $0x30] sm:$0xff]
    %v1758 = vld [vmem:[%s1750 + $0x38] sm:$0xff]
    %v1759 = vld [vmem:[%s1750 + $0x40] sm:$0xff]
    %v1760 = vld [vmem:[%s1750 + $0x48] sm:$0xff]
    %v1761 = vld [vmem:[%s1750 + $0x50] sm:$0xff]
    %v1762 = vld [vmem:[%s1750 + $0x58] sm:$0xff]
    %v1763 = vld [vmem:[%s1750 + $0x60] sm:$0xff]
    %v1764 = vld [vmem:[%s1750 + $0x68] sm:$0xff]
    %v1765 = vld [vmem:[%s1750 + $0x70] sm:$0xff]
    %v1766 = vld [vmem:[%s1750 + $0x78] sm:$0xff]
    %1767 = vmatprep.subr.mxu0 0.0
    %1768 = vmatpush1.msra.mxu0 %v1751
    %1769 = vmatprep.subr.mxu0 0.0
    %1770 = vmatpush1.msra.mxu0 %v1752
    %1771 = vmatprep.subr.mxu0 0.0
    %1772 = vmatpush1.msra.mxu0 %v1753
    %1773 = vmatprep.subr.mxu0 0.0
    %1774 = vmatpush1.msra.mxu0 %v1754
    %1775 = vmatprep.subr.mxu0 0.0
    %1776 = vmatpush1.msra.mxu0 %v1755
    %1777 = vmatprep.subr.mxu0 0.0
    %1778 = vmatpush1.msra.mxu0 %v1756
    %1779 = vmatprep.subr.mxu0 0.0
    %1780 = vmatpush1.msra.mxu0 %v1757
    %1781 = vmatprep.subr.mxu0 0.0
    %1782 = vmatpush1.msra.mxu0 %v1758
    %1783 = vmatprep.subr.mxu0 0.0
    %1784 = vmatpush1.msra.mxu0 %v1759
    %1785 = vmatprep.subr.mxu0 0.0
    %1786 = vmatpush1.msra.mxu0 %v1760
    %1787 = vmatprep.subr.mxu0 0.0
    %1788 = vmatpush1.msra.mxu0 %v1761
    %1789 = vmatprep.subr.mxu0 0.0
    %1790 = vmatpush1.msra.mxu0 %v1762
    %1791 = vmatprep.subr.mxu0 0.0
    %1792 = vmatpush1.msra.mxu0 %v1763
    %1793 = vmatprep.subr.mxu0 0.0
    %1794 = vmatpush1.msra.mxu0 %v1764
    %1795 = vmatprep.subr.mxu0 0.0
    %1796 = vmatpush1.msra.mxu0 %v1765
    %1797 = vmatprep.subr.mxu0 0.0
    %1798 = vmatpush1.msra.mxu0 %v1766
    %1799 = vmatprep.subr.mxu0 0.0
    %1800 = vmatpush1.msra.mxu0 0.0
    %1801 = vmatprep.subr.mxu0 0.0
    %1802 = vmatpush1.msra.mxu0 0.0
    %1803 = vmatprep.subr.mxu0 0.0
    %1804 = vmatpush1.msra.mxu0 0.0
    %1805 = vmatprep.subr.mxu0 0.0
    %1806 = vmatpush1.msra.mxu0 0.0
    %1807 = vmatprep.subr.mxu0 0.0
    %1808 = vmatpush1.msra.mxu0 0.0
    %1809 = vmatprep.subr.mxu0 0.0
    %1810 = vmatpush1.msra.mxu0 0.0
    %1811 = vmatprep.subr.mxu0 0.0
    %1812 = vmatpush1.msra.mxu0 0.0
    %1813 = vmatprep.subr.mxu0 0.0
    %1814 = vmatpush1.msra.mxu0 0.0
    %1815 = vmatprep.subr.mxu0 0.0
    %1816 = vmatpush1.msra.mxu0 0.0
    %1817 = vmatprep.subr.mxu0 0.0
    %1818 = vmatpush1.msra.mxu0 0.0
    %1819 = vmatprep.subr.mxu0 0.0
    %1820 = vmatpush1.msra.mxu0 0.0
    %1821 = vmatprep.subr.mxu0 0.0
    %1822 = vmatpush1.msra.mxu0 0.0
    %1823 = vmatprep.subr.mxu0 0.0
    %1824 = vmatpush1.msra.mxu0 0.0
    %1825 = vmatprep.subr.mxu0 0.0
    %1826 = vmatpush1.msra.mxu0 0.0
    %1827 = vmatprep.subr.mxu0 0.0
    %1828 = vmatpush1.msra.mxu0 0.0
    %1829 = vmatprep.subr.mxu0 0.0
    %1830 = vmatpush1.msra.mxu0 0.0
    %1831 = vmatprep.mubr.f32.mxu0 0.0
    %1832 = vmatmul.mubr.f32.gmra.mrb[0].mxu0 %v1740
    %v1833 = vpop.f32.mrb[0].mxu0
    %v1834 = vadd.f32 0.0, %v1833
    %v1835 = vpop.f32.mrb[0].mxu0
    %1836 = vmatprep.mubr.f32.mxu0 0.0
    %1837 = vmatmul.mubr.f32.gmra.mrb[0].mxu0 %v1741
    %v1838 = vpop.f32.mrb[0].mxu0
    %v1839 = vadd.f32 0.0, %v1838
    %v1840 = vpop.f32.mrb[0].mxu0
    %1841 = vmatprep.mubr.f32.mxu0 0.0
    %1842 = vmatmul.mubr.f32.gmra.mrb[0].mxu0 %v1744
    %v1843 = vpop.f32.mrb[0].mxu0
    %v1844 = vadd.f32 0.0, %v1843
    %v1845 = vpop.f32.mrb[0].mxu0
    %1846 = vmatprep.mubr.f32.mxu0 0.0
    %1847 = vmatmul.mubr.f32.gmra.mrb[0].mxu0 %v1745
    %v1848 = vpop.f32.mrb[0].mxu0
    %v1849 = vadd.f32 0.0, %v1848
    %v1850 = vpop.f32.mrb[0].mxu0
    %1851 = vdwg.mxu0
    %v1852 = vadd.f32 %v1734, %v1834
    %v1853 = vadd.f32 %v1735, %v1839
    %v1854 = vadd.f32 %v1736, %v1844
    %v1855 = vadd.f32 %v1737, %v1849
    %v1856 = vld [vmem:[%s6] sm:$0x1]
    %v1858 = vlaneseq
    %v1859 = vshrl.u32 %v1858, 7
    %v1860 = vsub.s32 0, %v1859
    %v1861 = vrot.slane %v1856, %v1860
    %v1863 = vadd.f32 %v1852, %v1861
    %v1864 = vadd.f32 %v1853, %v1861
    %v1865 = vadd.f32 %v1854, %v1861
    %v1866 = vadd.f32 %v1855, %v1861
    %v1867 = vtanh.pop %v1863
    %v1868 = vtanh.pop %v1864
    %v1869 = vtanh.pop %v1865
    %v1870 = vtanh.pop %v1866
    %1871 = vst [vmem:[%s7] sm:$0xff] %v1867
    %1872 = vst [vmem:[%s7 + $0x8] sm:$0xff] %v1868
    %1873 = vst [vmem:[%s7 + $0x10] sm:$0xff] %v1869
    %1874 = vst [vmem:[%s7 + $0x18] sm:$0xff] %v1870
    // Predicated region
    $region46: #{patemb_forward.1} parent=1 // pred_check
      _
    $region47: #{patemb_forward.1} parent=1 // pred_check_branch
      %1876 = sbr.rel (0) target = $region49
    $region48: #{patemb_forward.1} parent=1 // pred_region
      _
    $region49: #{patemb_forward.1} parent=1 // pred_fallthru
      _
    // Predicated region
    $region50: #{patemb_forward.1} parent=1 // pred_check
      _
    $region51: #{patemb_forward.1} parent=1 // pred_check_branch
      %1878 = sbr.rel (0) target = $region53
    $region52: #{patemb_forward.1} parent=1 // pred_region
      _
    $region53: #{patemb_forward.1} parent=1 // pred_fallthru
      _
    %1879 = vsyncpa [#allocation3], 1
    %1880 = vsyncpa [#allocation5], 1
    %1881 = vsyncpa [#allocation8], 1

</llo_original>
